<compile_context>
chip_gen: v7x
topology: tpu7x:2x2x1
jax: 0.10.0
libtpu: 0.0.40
codegen_flags: <defaults>
</compile_context>

<pallas_src>
import functools
import numpy as np
import jax
import jax.numpy as jnp
from jax.experimental import pallas as pl
from jax.experimental.pallas import tpu as pltpu


# ----------------------------- channel split (same math as the torch module) ---
def _mixconv_channels(out_ch, k, method="equal_params"):
    groups = len(k)
    if method == "equal_ch":
        i = np.floor(np.linspace(0, groups - 1e-06, out_ch))
        ch = [int((i == g).sum()) for g in range(groups)]
    else:  # 'equal_params'
        b = [out_ch] + [0] * groups
        a = np.eye(groups + 1, groups, k=-1)
        a -= np.roll(a, 1, axis=1)
        a *= np.array(k) ** 2
        a[0] = 1
        ch = np.linalg.lstsq(a, b, rcond=None)[0].round().astype(int)
        ch = [int(c) for c in ch]
    return ch


def _round_up(x, m):
    return (x + m - 1) // m * m


# ----------------------------- fused Pallas conv kernel ------------------------
def _mixconv_kernel(x_ref, t_ref, b_ref, o_ref, *, k, grid_h):
    # x_ref: (Hp, Cl)       bf16  padded rows of one image, lane-dense (Cl % 128 == 0)
    # t_ref: (k*Cl, TWC)    bf16  Toeplitz-packed fused weight slab (all branches)
    # b_ref: (1, TWC)       f32   concatenated bias slab
    # o_ref: (TH, TWC)      f32   output rows (lane-dense last dim)
    th = o_ref.shape[0]
    if grid_h == 1:
        row0 = 0                                           # static-slice path
    else:
        row0 = pl.multiple_of(pl.program_id(1) * th, th)   # h-tile row offset

    # Load the (TH + k - 1)-row window ONCE, then build the im2row LHS with k
    # static sublane-shifted slices (lane-dense; misaligned-sublane copies only).
    win = x_ref[pl.ds(row0, th + k - 1), :]                        # (th+k-1, Cl)
    lhs = jnp.concatenate([win[dy:dy + th, :] for dy in range(k)], axis=-1)

    # Single big-K matmul (K_dim = k*Cl): the MXU accumulates in f32 internally,
    # so no register/VMEM accumulator is needed even for large TH, and there is
    # only one result drain per tile.
    acc = jnp.dot(lhs, t_ref[...], preferred_element_type=jnp.float32)
    o_ref[...] = (acc + b_ref[...]).astype(o_ref.dtype)


# ----------------------------- tiling heuristics --------------------------------
def _pick_tile_h(H, n_batch, k, cl, cap=256, lhs_budget=4 << 20):
    """Largest divisor of H (<= cap, multiple of 16 preferred) whose im2row LHS
    (th, k*cl) bf16 stays within a modest VMEM budget; shrunk if needed so the
    two v7x TensorCores both get a grid step."""
    cap = max(8, min(cap, lhs_budget // max(1, k * cl * 2)))
    divs = [d for d in range(1, min(H, cap) + 1) if H % d == 0]
    th = 1
    for mod in (16, 8, 1):
        cand = [d for d in divs if d % mod == 0]
        if cand:
            th = max(cand)
            break
    if n_batch * (H // th) < 2 and th > 1:       # expose >= 2 parallel steps
        smaller = [d for d in divs if d < th]
        if smaller:
            th = max(smaller)
    return th


def _pick_col_tile(total_cols, k_dim, budget_bytes=8 << 20):
    """Largest divisor of W*Cout whose (k_dim, tile) bf16 weight slab fits the
    per-step VMEM budget (double-buffered); lane-dense (x128) preferred."""
    limit = max(128, budget_bytes // (k_dim * 2 * 2))
    if total_cols <= limit:
        return total_cols
    divs = [d for d in range(1, total_cols + 1)
            if total_cols % d == 0 and d <= limit]
    lane = [d for d in divs if d % 128 == 0]
    return max(lane) if lane else max(divs)


# ----------------------------- module wrapper ----------------------------------
class MixConv2dPallas:
    def __init__(self, in_ch, out_ch, k=(3, 5, 7), stride=1, dilation=1,
                 bias=True, method="equal_params", key=None):
        assert stride == 1 and dilation == 1, "only default stride/dilation supported"
        assert all(kg % 2 == 1 for kg in k), "only odd kernel sizes supported"
        self.in_ch = in_ch
        self.k = tuple(k)
        self.max_k = max(self.k)
        self.ch = _mixconv_channels(out_ch, self.k, method)
        assert all(c > 0 for c in self.ch), f"degenerate 0-channel branch: {self.ch}"
        self.out_ch = int(sum(self.ch))
        self.params = []
        key = jax.random.PRNGKey(0) if key is None else key
        for g, kg in enumerate(self.k):
            key, wkey, bkey = jax.random.split(key, 3)
            fan_in = in_ch * kg * kg
            bound = 1.0 / np.sqrt(fan_in)
            # PyTorch stores (Cout, Cin, k, k); we store (k*k, Cin, Cout_g).
            w = jax.random.uniform(wkey, (kg * kg, in_ch, self.ch[g]),
                                   minval=-bound, maxval=bound, dtype=jnp.float32)
            if bias:
                bvec = jax.random.uniform(bkey, (1, self.ch[g]),
                                          minval=-bound, maxval=bound,
                                          dtype=jnp.float32)
            else:
                bvec = jnp.zeros((1, self.ch[g]), jnp.float32)
            self.params.append((w, bvec))
        self._pver = 0          # bump whenever self.params change (cache key)
        self._packed = {}       # Toeplitz-packed weights, keyed (W, Cl, pver)
        self._fns = {}          # built pallas_call callables, keyed by shape
        self._buffered_ok = None  # feature-probe result for pl.Buffered(1)

    def set_params(self, params):
        """Replace branch parameters; invalidates cached packed weights."""
        self.params = list(params)
        self._pver += 1
        self._packed.clear()

    # ------------------------- weight packing ----------------------------------
    def _pack(self, W, Cl):
        """Pack all branches into one zero-padded fused weight, then into a
        width-Toeplitz (K*Cl, W*Cout) matrix so the conv + channel-concat become
        a single big-K row matmul."""
        key = (W, Cl, self._pver)
        if key in self._packed:
            return self._packed[key]
        K, Cin, Cout = self.max_k, self.in_ch, self.out_ch

        # Fused (K, K, Cin, Cout): branch g occupies a centered kg x kg tap
        # window and its own output-channel slice; zeros elsewhere, so one KxK
        # 'same' conv == channel-concat (torch Concat, dim=1) of the branch convs.
        wf = np.zeros((K, K, Cin, Cout), np.float32)
        c0 = 0
        for kg, (w, _) in zip(self.k, self.params):
            off = (K - kg) // 2
            cg = w.shape[-1]
            wf[off:off + kg, off:off + kg, :, c0:c0 + cg] = \
                np.asarray(w).reshape(kg, kg, Cin, cg)
            c0 += cg

        # Toeplitz: T[dy*Cl + (x+dx)*Cin + c, x*Cout + co] = wf[dy, dx, c, co].
        # TODO(synk): only ~K/Wp of each column is nonzero; shrinking it needs
        #             W-halo input tiling (manual DMA) — left for large widths.
        toep = np.zeros((K, Cl, W * Cout), np.float32)
        for x in range(W):
            for dx in range(K):
                j0 = (x + dx) * Cin
                toep[:, j0:j0 + Cin, x * Cout:(x + 1) * Cout] = wf[:, dx]
        t2d = toep.reshape(K * Cl, W * Cout)

        bias_cat = np.concatenate([np.asarray(b).reshape(-1) for _, b in self.params])
        b_flat = np.tile(bias_cat, W)[None, :].astype(np.float32)     # (1, W*Cout)

        packed = (jnp.asarray(t2d, dtype=jnp.bfloat16),
                  jnp.asarray(b_flat, dtype=jnp.float32))
        self._packed[key] = packed
        return packed

    # ------------------------- pallas_call builder ------------------------------
    def _build_fn(self, N, H, W, Hp, Cl, th, grid_h, twc, grid_w, use_buffered):
        K, Cout = self.max_k, self.out_ch
        kern = functools.partial(_mixconv_kernel, k=K, grid_h=grid_h)
        const_kwargs = {}
        if use_buffered:
            # Weight/bias index maps are grid-invariant here: single-buffer them
            # (halves their VMEM; they are DMA'd exactly once anyway).
            const_kwargs = dict(pipeline_mode=pl.Buffered(1))
        return pl.pallas_call(
            kern,
            out_shape=jax.ShapeDtypeStruct((N, H, W * Cout), jnp.float32),
            grid=(N, grid_h, grid_w),
            in_specs=[
                pl.BlockSpec((None, Hp, Cl), lambda n, h, w: (n, 0, 0)),
                pl.BlockSpec((K * Cl, twc), lambda n, h, w: (0, w), **const_kwargs),
                pl.BlockSpec((1, twc), lambda n, h, w: (0, w), **const_kwargs),
            ],
            out_specs=pl.BlockSpec((None, th, twc), lambda n, h, w: (n, h, w)),
            compiler_params=pltpu.CompilerParams(
                dimension_semantics=("parallel", "parallel", "parallel")),
        )

    # ------------------------- forward ------------------------------------------
    def __call__(self, x_nchw):
        N, Cin, H, W = x_nchw.shape
        assert Cin == self.in_ch
        K, Cout = self.max_k, self.out_ch
        pad = K // 2
        Hp, Wp = H + 2 * pad, W + 2 * pad
        Cl = _round_up(Wp * Cin, 128)         # lane-dense padded row width

        # Single shared pad (max_k//2) in NHWC; channels folded into lanes and
        # rows lane-padded to a multiple of 128.
        # TODO(synk): make the module NHWC/flat-layout native to drop these
        #             wrapper transposes/pads (2-3 extra HBM round trips).
        x_nhwc = jnp.transpose(x_nchw, (0, 2, 3, 1)).astype(jnp.bfloat16)
        xp = jnp.pad(x_nhwc, ((0, 0), (pad, pad), (pad, pad), (0, 0)))
        xr = xp.reshape(N, Hp, Wp * Cin)
        if Cl > Wp * Cin:
            xr = jnp.pad(xr, ((0, 0), (0, 0), (0, Cl - Wp * Cin)))

        t2d, b_flat = self._pack(W, Cl)

        th = _pick_tile_h(H, N, K, Cl)
        grid_h = H // th
        twc = _pick_col_tile(W * Cout, K * Cl)
        grid_w = (W * Cout) // twc

        def run(use_buffered):
            use_buffered = bool(use_buffered) and grid_w == 1
            fkey = (N, H, W, th, twc, use_buffered)
            fn = self._fns.get(fkey)
            if fn is None:
                fn = self._build_fn(N, H, W, Hp, Cl, th, grid_h, twc, grid_w,
                                    use_buffered)
                self._fns[fkey] = fn
            return fn(xr, t2d, b_flat)

        if grid_w == 1 and self._buffered_ok is None:
            # One-time feature probe for single-buffered (pl.Buffered(1)) weight
            # and bias blocks; fall back cleanly if this jax/Mosaic rejects it.
            try:
                y_flat = jax.block_until_ready(run(True))
                self._buffered_ok = True
            except Exception:
                self._buffered_ok = False
                y_flat = run(False)
        else:
            y_flat = run(self._buffered_ok)

        # (N, H, W*Cout) -> NCHW. The channel concat (torch Concat, dim=1) already
        # happened inside the kernel via the packed channel offsets.
        y = y_flat.reshape(N, H, W, Cout)
        return jnp.transpose(y, (0, 3, 1, 2))


# ----------------------------- pure-JAX reference ------------------------------
def _ref_forward(module, x_nchw):
    """Reference with the same numerics: bf16 operands, f32 accumulation."""
    Cin = x_nchw.shape[1]
    xb = x_nchw.astype(jnp.bfloat16)
    outs = []
    for kg, (w, b) in zip(module.k, module.params):
        w_oihw = jnp.transpose(w.reshape(kg, kg, Cin, -1), (3, 2, 0, 1))
        w_oihw = w_oihw.astype(jnp.bfloat16)
        y = jax.lax.conv_general_dilated(
            xb, w_oihw, window_strides=(1, 1),
            padding=[(kg // 2, kg // 2)] * 2,
            dimension_numbers=("NCHW", "OIHW", "NCHW"),
            preferred_element_type=jnp.float32,
        )
        y = y + b[0][None, :, None, None]
        outs.append(y)
    return jnp.concatenate(outs, axis=1)


if __name__ == "__main__":
    N, Cin, H, W = 2, 4, 16, 16
    out_ch = 8

    key = jax.random.PRNGKey(0)
    xkey, pkey = jax.random.split(key)
    x = jax.random.normal(xkey, (N, Cin, H, W), dtype=jnp.float32)

    module = MixConv2dPallas(Cin, out_ch, k=(3, 5, 7), bias=True,
                             method="equal_params", key=pkey)

    y = jax.block_until_ready(module(x))
    assert y.shape == (N, module.out_ch, H, W), y.shape

    y_ref = jax.block_until_ready(_ref_forward(module, x))
    np.testing.assert_allclose(np.asarray(y), np.asarray(y_ref),
                               rtol=2e-3, atol=2e-3)

    print("KERNEL_OK")
</pallas_src>

<mosaic_0001>
module attributes {stable_mosaic.version = 11 : i64} {
  func.func @_mixconv_kernel(%arg0: i32, %arg1: i32, %arg2: i32, %arg3: memref<1x22x128xbf16, #tpu.memory_space<vmem>>, %arg4: memref<896x128xbf16, #tpu.memory_space<vmem>>, %arg5: memref<1x128xf32, #tpu.memory_space<vmem>>, %arg6: memref<1x16x128xf32, #tpu.memory_space<vmem>>) attributes {dimension_semantics = [#tpu.dimension_semantics<parallel>, #tpu.dimension_semantics<parallel>, #tpu.dimension_semantics<parallel>], iteration_bounds = array<i64: 2, 1, 1>, scalar_prefetch = 0 : i64, scratch_operands = 0 : i64, tpu.core_type = #tpu.core_type<tc>, window_params = [{transform_indices = @transform_0, window_bounds = array<i64: 1, 22, 128>}, {pipeline_mode = #tpu.pipeline_mode<synchronous>, transform_indices = @transform_1, window_bounds = array<i64: 896, 128>}, {pipeline_mode = #tpu.pipeline_mode<synchronous>, transform_indices = @transform_2, window_bounds = array<i64: 1, 128>}, {transform_indices = @transform_3, window_bounds = array<i64: 1, 16, 128>}]} {
    %c0 = arith.constant 0 : index
    %c0_0 = arith.constant 0 : index
    %c0_1 = arith.constant 0 : index
    %0 = vector.load %arg3[%c0, %c0_0, %c0_1] : memref<1x22x128xbf16, #tpu.memory_space<vmem>>, vector<1x22x128xbf16>
    %1 = vector.shape_cast %0 : vector<1x22x128xbf16> to vector<22x128xbf16>
    %2 = vector.extract_strided_slice %1 {offsets = [0, 0], sizes = [16, 128], strides = [1, 1]} : vector<22x128xbf16> to vector<16x128xbf16>
    %3 = vector.extract_strided_slice %1 {offsets = [1, 0], sizes = [16, 128], strides = [1, 1]} : vector<22x128xbf16> to vector<16x128xbf16>
    %4 = vector.extract_strided_slice %1 {offsets = [2, 0], sizes = [16, 128], strides = [1, 1]} : vector<22x128xbf16> to vector<16x128xbf16>
    %5 = vector.extract_strided_slice %1 {offsets = [3, 0], sizes = [16, 128], strides = [1, 1]} : vector<22x128xbf16> to vector<16x128xbf16>
    %6 = vector.extract_strided_slice %1 {offsets = [4, 0], sizes = [16, 128], strides = [1, 1]} : vector<22x128xbf16> to vector<16x128xbf16>
    %7 = vector.extract_strided_slice %1 {offsets = [5, 0], sizes = [16, 128], strides = [1, 1]} : vector<22x128xbf16> to vector<16x128xbf16>
    %8 = vector.extract_strided_slice %1 {offsets = [6, 0], sizes = [16, 128], strides = [1, 1]} : vector<22x128xbf16> to vector<16x128xbf16>
    %9 = tpu.concatenate %2, %3, %4, %5, %6, %7, %8 in 1 : vector<16x128xbf16>, vector<16x128xbf16>, vector<16x128xbf16>, vector<16x128xbf16>, vector<16x128xbf16>, vector<16x128xbf16>, vector<16x128xbf16> -> vector<16x896xbf16>
    %c0_2 = arith.constant 0 : index
    %c0_3 = arith.constant 0 : index
    %10 = vector.load %arg4[%c0_2, %c0_3] : memref<896x128xbf16, #tpu.memory_space<vmem>>, vector<896x128xbf16>
    %cst = arith.constant dense<0.000000e+00> : vector<16x128xf32>
    %11 = tpu.matmul %9, %10, %cst {dimension_numbers = #tpu.dot_dimension_numbers<[1], [0], [0], [1], [0, 0, 1, 1], [], []>} : vector<16x896xbf16>, vector<896x128xbf16>, vector<16x128xf32> -> vector<16x128xf32>
    %c0_4 = arith.constant 0 : index
    %c0_5 = arith.constant 0 : index
    %12 = vector.load %arg5[%c0_4, %c0_5] : memref<1x128xf32, #tpu.memory_space<vmem>>, vector<1x128xf32>
    %13 = vector.broadcast %12 : vector<1x128xf32> to vector<16x128xf32>
    %14 = arith.addf %11, %13 : vector<16x128xf32>
    %c0_6 = arith.constant 0 : index
    %c0_7 = arith.constant 0 : index
    %c0_8 = arith.constant 0 : index
    %15 = vector.load %arg6[%c0_6, %c0_7, %c0_8] : memref<1x16x128xf32, #tpu.memory_space<vmem>>, vector<1x16x128xf32>
    %16 = vector.shape_cast %15 : vector<1x16x128xf32> to vector<16x128xf32>
    %17 = vector.shape_cast %14 : vector<16x128xf32> to vector<1x16x128xf32>
    tpu.vector_store %arg6[%c0_6, %c0_7, %c0_8], %17 {strides = array<i32>} : memref<1x16x128xf32, #tpu.memory_space<vmem>>, vector<1x16x128xf32>,
    return
  }
  func.func @transform_0(%arg0: i32, %arg1: i32, %arg2: i32) -> (i32, i32, i32) {
    %c0_i32 = arith.constant 0 : i32
    %c0_i32_0 = arith.constant 0 : i32
    %c0_i32_1 = arith.constant 0 : i32
    return %arg0, %c0_i32, %c0_i32_0 : i32, i32, i32
  }
  func.func @transform_1(%arg0: i32, %arg1: i32, %arg2: i32) -> (i32, i32) {
    %c0_i32 = arith.constant 0 : i32
    %c0_i32_0 = arith.constant 0 : i32
    return %c0_i32, %arg2 : i32, i32
  }
  func.func @transform_2(%arg0: i32, %arg1: i32, %arg2: i32) -> (i32, i32) {
    %c0_i32 = arith.constant 0 : i32
    %c0_i32_0 = arith.constant 0 : i32
    return %c0_i32, %arg2 : i32, i32
  }
  func.func @transform_3(%arg0: i32, %arg1: i32, %arg2: i32) -> (i32, i32, i32) {
    %c0_i32 = arith.constant 0 : i32
    return %arg0, %arg1, %arg2 : i32, i32, i32
  }
}

module attributes {stable_mosaic.version = 11 : i64} {
  func.func @_mixconv_kernel(%arg0: i32, %arg1: i32, %arg2: i32, %arg3: memref<1x22x128xbf16, #tpu.memory_space<vmem>>, %arg4: memref<896x128xbf16, #tpu.memory_space<vmem>>, %arg5: memref<1x128xf32, #tpu.memory_space<vmem>>, %arg6: memref<1x16x128xf32, #tpu.memory_space<vmem>>) attributes {dimension_semantics = [#tpu.dimension_semantics<parallel>, #tpu.dimension_semantics<parallel>, #tpu.dimension_semantics<parallel>], iteration_bounds = array<i64: 2, 1, 1>, scalar_prefetch = 0 : i64, scratch_operands = 0 : i64, tpu.core_type = #tpu.core_type<tc>, window_params = [{transform_indices = @transform_0, window_bounds = array<i64: 1, 22, 128>}, {transform_indices = @transform_1, window_bounds = array<i64: 896, 128>}, {transform_indices = @transform_2, window_bounds = array<i64: 1, 128>}, {transform_indices = @transform_3, window_bounds = array<i64: 1, 16, 128>}]} {
    %c0 = arith.constant 0 : index
    %c0_0 = arith.constant 0 : index
    %c0_1 = arith.constant 0 : index
    %0 = vector.load %arg3[%c0, %c0_0, %c0_1] : memref<1x22x128xbf16, #tpu.memory_space<vmem>>, vector<1x22x128xbf16>
    %1 = vector.shape_cast %0 : vector<1x22x128xbf16> to vector<22x128xbf16>
    %2 = vector.extract_strided_slice %1 {offsets = [0, 0], sizes = [16, 128], strides = [1, 1]} : vector<22x128xbf16> to vector<16x128xbf16>
    %3 = vector.extract_strided_slice %1 {offsets = [1, 0], sizes = [16, 128], strides = [1, 1]} : vector<22x128xbf16> to vector<16x128xbf16>
    %4 = vector.extract_strided_slice %1 {offsets = [2, 0], sizes = [16, 128], strides = [1, 1]} : vector<22x128xbf16> to vector<16x128xbf16>
    %5 = vector.extract_strided_slice %1 {offsets = [3, 0], sizes = [16, 128], strides = [1, 1]} : vector<22x128xbf16> to vector<16x128xbf16>
    %6 = vector.extract_strided_slice %1 {offsets = [4, 0], sizes = [16, 128], strides = [1, 1]} : vector<22x128xbf16> to vector<16x128xbf16>
    %7 = vector.extract_strided_slice %1 {offsets = [5, 0], sizes = [16, 128], strides = [1, 1]} : vector<22x128xbf16> to vector<16x128xbf16>
    %8 = vector.extract_strided_slice %1 {offsets = [6, 0], sizes = [16, 128], strides = [1, 1]} : vector<22x128xbf16> to vector<16x128xbf16>
    %9 = tpu.concatenate %2, %3, %4, %5, %6, %7, %8 in 1 : vector<16x128xbf16>, vector<16x128xbf16>, vector<16x128xbf16>, vector<16x128xbf16>, vector<16x128xbf16>, vector<16x128xbf16>, vector<16x128xbf16> -> vector<16x896xbf16>
    %c0_2 = arith.constant 0 : index
    %c0_3 = arith.constant 0 : index
    %10 = vector.load %arg4[%c0_2, %c0_3] : memref<896x128xbf16, #tpu.memory_space<vmem>>, vector<896x128xbf16>
    %cst = arith.constant dense<0.000000e+00> : vector<16x128xf32>
    %11 = tpu.matmul %9, %10, %cst {dimension_numbers = #tpu.dot_dimension_numbers<[1], [0], [0], [1], [0, 0, 1, 1], [], []>} : vector<16x896xbf16>, vector<896x128xbf16>, vector<16x128xf32> -> vector<16x128xf32>
    %c0_4 = arith.constant 0 : index
    %c0_5 = arith.constant 0 : index
    %12 = vector.load %arg5[%c0_4, %c0_5] : memref<1x128xf32, #tpu.memory_space<vmem>>, vector<1x128xf32>
    %13 = vector.broadcast %12 : vector<1x128xf32> to vector<16x128xf32>
    %14 = arith.addf %11, %13 : vector<16x128xf32>
    %c0_6 = arith.constant 0 : index
    %c0_7 = arith.constant 0 : index
    %c0_8 = arith.constant 0 : index
    %15 = vector.load %arg6[%c0_6, %c0_7, %c0_8] : memref<1x16x128xf32, #tpu.memory_space<vmem>>, vector<1x16x128xf32>
    %16 = vector.shape_cast %15 : vector<1x16x128xf32> to vector<16x128xf32>
    %17 = vector.shape_cast %14 : vector<16x128xf32> to vector<1x16x128xf32>
    tpu.vector_store %arg6[%c0_6, %c0_7, %c0_8], %17 {strides = array<i32>} : memref<1x16x128xf32, #tpu.memory_space<vmem>>, vector<1x16x128xf32>,
    return
  }
  func.func @transform_0(%arg0: i32, %arg1: i32, %arg2: i32) -> (i32, i32, i32) {
    %c0_i32 = arith.constant 0 : i32
    %c0_i32_0 = arith.constant 0 : i32
    %c0_i32_1 = arith.constant 0 : i32
    return %arg0, %c0_i32, %c0_i32_0 : i32, i32, i32
  }
  func.func @transform_1(%arg0: i32, %arg1: i32, %arg2: i32) -> (i32, i32) {
    %c0_i32 = arith.constant 0 : i32
    %c0_i32_0 = arith.constant 0 : i32
    return %c0_i32, %arg2 : i32, i32
  }
  func.func @transform_2(%arg0: i32, %arg1: i32, %arg2: i32) -> (i32, i32) {
    %c0_i32 = arith.constant 0 : i32
    %c0_i32_0 = arith.constant 0 : i32
    return %c0_i32, %arg2 : i32, i32
  }
  func.func @transform_3(%arg0: i32, %arg1: i32, %arg2: i32) -> (i32, i32, i32) {
    %c0_i32 = arith.constant 0 : i32
    return %arg0, %arg1, %arg2 : i32, i32, i32
  }
}

</mosaic_0001>

<llo_original>
// kernel: tpu_custom_call.1
$region0: #{tpu_custom_call.1}
  #allocation0 [shape = 'u32[]', space=smem, size = 0x4, offset = 0x4, fixed_abs, tag = 'smem constant byte address 0x4 - core index']
  #allocation1 [shape = 'u32[144,128]{1,0:T(1,128)}', space=vmem, size = 0x12000, scoped, tag = 'internal scratch']
  %s0 = inlined_call_operand.vmem [shape: bf16[2,22,128], index: 0, kind: input, shape index: {}]
  %s1 = inlined_call_operand.hbm [shape: bf16[896,128], index: 1, kind: input, shape index: {}]
  %s2 = inlined_call_operand.vmem [shape: f32[1,128], index: 2, kind: input, shape index: {}]
  %s3 = inlined_call_operand.hbm [shape: f32[2,16,128], index: 3, kind: output, shape index: {}]
  %s4 = sld [smem:[#allocation0]]
  $region49: #{tpu_custom_call.1} parent=0
    _
  %s6 = ssub.s32 1, %s4
  %s7 = scalar_select 0, %s6, %s4
  $region1: #{tpu_custom_call.1} parent=0
    #allocation2 [shape = 'u8[229376]{0}', space=vmem, size = 0x38000, scoped, tag = 'input window, operand 1, single buffered']
    #allocation3 [shape = 's32[2]{0}', space=sflag, size = 0x8, scoped, tag = 'scoped memory for tpu_custom_call.1']
    #allocation4 [shape = 's32[2]{0}', space=sflag, size = 0x8, scoped, tag = 'scoped memory for tpu_custom_call.1']
    #allocation5 [shape = 'u8[16384]{0}', space=vmem, size = 0x4000, scoped, tag = 'output window, operand 0']
    %8 = vsyncpa [#allocation3], 0
    %9 = vsyncpa [#allocation4], 0
    %s10 = scalar_lea.sflag [#allocation4], 1
    %11 = vsyncpa %s10, 0
    loop: start=0, step=1, limit=4
    $region2: #{tpu_custom_call.1} parent=1 // loop_pre_header
      _
    $region3: #{tpu_custom_call.1} parent=1 // loop_header
      %s13 = sphi 0, %s17
      %p14 = scmp.ge.s32.totalorder %s13, 4
      %s20 = sphi 0, %s39
      %s21 = sphi 0, %s35
      %s22 = sphi 0, %s31
      %s23 = sphi 0, %s20
      %s24 = sphi 0, %s21
      %s25 = sphi 0, %s22
      %s26 = sphi 0, %s23
      %s27 = sphi 0, %s24
      %s28 = sphi 0, %s25
      %s42 = sphi 0, %s44
      %s45 = sphi 0, %s42
      %s46 = sphi 0, %s45
      %s62 = sphi 0, %s46
      %s68 = sphi 0, %s70
      %s71 = sphi 0, %s68
      %s72 = sphi 0, %s71
      %s88 = sphi 0, %s72
      %s94 = sphi 0, %s96
      %s97 = sphi 0, %s94
      %s98 = sphi 0, %s97
      %s114 = sphi 0, %s98
      %s124 = sphi 0, %s126
      %s127 = sphi 0, %s124
      %s128 = sphi 0, %s127
      %s144 = sphi 0, %s128
    $region4: #{tpu_custom_call.1} parent=1 // loop_header_branch
      %16 = sbr.rel (%p14) target = $region8
    $region5: #{tpu_custom_call.1} parent=1 // loop_body
      %s18 = ssub.s32 %s13, 1
      %s19 = ssub.s32 %s13, 2
      %s29 = sadd.s32 1, %s22
      %p30 = scmp.ge.s32.totalorder %s29, 1
      %s31 = scalar_select %p30, 0, %s29
      %s32 = sadd.s32 1, %s21
      %s33 = scalar_select %p30, %s32, %s21
      %p34 = scmp.ge.s32.totalorder %s33, 1
      %s35 = scalar_select %p34, 0, %s33
      %s36 = sadd.s32 1, %s20
      %s37 = scalar_select %p34, %s36, %s20
      %p38 = scmp.ge.s32.totalorder %s37, 2
      %s39 = scalar_select %p38, 0, %s37
      %s40 = ssub.s32 %s20, %s39
      %p41 = scmp.eq.s32.totalorder %s40, 0
      %s43 = sadd.s32 %s42, 1
      %s44 = scalar_select %p41, %s42, %s43
      %p47 = pneg %p41
      %p48 = scmp.eq.s32.totalorder %s13, 1
      %p49 = por %p47, %p48
      %p50 = scmp.ne.s32.totalorder %s42, %s45
      %p51 = scmp.eq.s32.totalorder %s13, 0
      %p52 = por %p50, %p51
      %p53 = scmp.ne.s32.totalorder %s42, %s45
      %p54 = scmp.eq.s32.totalorder %s18, 1
      %p55 = por %p53, %p54
      %p56 = scmp.ne.s32.totalorder %s45, %s46
      %p57 = scmp.eq.s32.totalorder %s18, 0
      %p58 = por %p56, %p57
      %p59 = scmp.ne.s32.totalorder %s45, %s46
      %p60 = scmp.eq.s32.totalorder %s19, 1
      %p61 = por %p59, %p60
      %p63 = scmp.ne.s32.totalorder %s46, %s62
      %p64 = scmp.eq.s32.totalorder %s19, 0
      %p65 = por %p63, %p64
      %s66 = ssub.s32 %s22, %s31
      %p67 = scmp.eq.s32.totalorder %s66, 0
      %s69 = sadd.s32 %s68, 1
      %s70 = scalar_select %p67, %s68, %s69
      %p73 = pneg %p67
      %p74 = scmp.eq.s32.totalorder %s13, 1
      %p75 = por %p73, %p74
      %p76 = scmp.ne.s32.totalorder %s68, %s71
      %p77 = scmp.eq.s32.totalorder %s13, 0
      %p78 = por %p76, %p77
      %p79 = scmp.ne.s32.totalorder %s68, %s71
      %p80 = scmp.eq.s32.totalorder %s18, 1
      %p81 = por %p79, %p80
      %p82 = scmp.ne.s32.totalorder %s71, %s72
      %p83 = scmp.eq.s32.totalorder %s18, 0
      %p84 = por %p82, %p83
      %p85 = scmp.ne.s32.totalorder %s71, %s72
      %p86 = scmp.eq.s32.totalorder %s19, 1
      %p87 = por %p85, %p86
      %p89 = scmp.ne.s32.totalorder %s72, %s88
      %p90 = scmp.eq.s32.totalorder %s19, 0
      %p91 = por %p89, %p90
      %s92 = ssub.s32 %s22, %s31
      %p93 = scmp.eq.s32.totalorder %s92, 0
      %s95 = sadd.s32 %s94, 1
      %s96 = scalar_select %p93, %s94, %s95
      %p99 = pneg %p93
      %p100 = scmp.eq.s32.totalorder %s13, 1
      %p101 = por %p99, %p100
      %p102 = scmp.ne.s32.totalorder %s94, %s97
      %p103 = scmp.eq.s32.totalorder %s13, 0
      %p104 = por %p102, %p103
      %p105 = scmp.ne.s32.totalorder %s94, %s97
      %p106 = scmp.eq.s32.totalorder %s18, 1
      %p107 = por %p105, %p106
      %p108 = scmp.ne.s32.totalorder %s97, %s98
      %p109 = scmp.eq.s32.totalorder %s18, 0
      %p110 = por %p108, %p109
      %p111 = scmp.ne.s32.totalorder %s97, %s98
      %p112 = scmp.eq.s32.totalorder %s19, 1
      %p113 = por %p111, %p112
      %p115 = scmp.ne.s32.totalorder %s98, %s114
      %p116 = scmp.eq.s32.totalorder %s19, 0
      %p117 = por %p115, %p116
      %s118 = ssub.s32 %s20, %s39
      %s119 = ssub.s32 %s21, %s35
      %s120 = sor.u32 %s118, %s119
      %s121 = ssub.s32 %s22, %s31
      %s122 = sor.u32 %s120, %s121
      %p123 = scmp.eq.s32.totalorder %s122, 0
      %s125 = sadd.s32 %s124, 1
      %s126 = scalar_select %p123, %s124, %s125
      %p129 = pneg %p123
      %p130 = scmp.eq.s32.totalorder %s13, 1
      %p131 = por %p129, %p130
      %p132 = scmp.ne.s32.totalorder %s124, %s127
      %p133 = scmp.eq.s32.totalorder %s13, 0
      %p134 = por %p132, %p133
      %p135 = scmp.ne.s32.totalorder %s124, %s127
      %p136 = scmp.eq.s32.totalorder %s18, 1
      %p137 = por %p135, %p136
      %p138 = scmp.ne.s32.totalorder %s127, %s128
      %p139 = scmp.eq.s32.totalorder %s18, 0
      %p140 = por %p138, %p139
      %p141 = scmp.ne.s32.totalorder %s127, %s128
      %p142 = scmp.eq.s32.totalorder %s19, 1
      %p143 = por %p141, %p142
      %p145 = scmp.ne.s32.totalorder %s128, %s144
      %p146 = scmp.eq.s32.totalorder %s19, 0
      %p147 = por %p145, %p146
      %p148 = scmp.le.s32.totalorder 1, %s13
      %p149 = scmp.lt.s32.totalorder %s13, 3
      %p150 = pnand %p148, %p149
      %p151 = pneg %p150
      // Predicated region
      $region9: #{tpu_custom_call.1} parent=5 // pred_check
        _
      $region10: #{tpu_custom_call.1} parent=5 // pred_check_branch
        %153 = sbr.rel (%p150) target = $region12
      $region11: #{tpu_custom_call.1} parent=5 // pred_region
        %s154 = ssub.s32 %s13, 1
        // Predicated region
        $region13: #{tpu_custom_call.1} parent=11 // pred_check
          %p155 = pneg %p84
        $region14: #{tpu_custom_call.1} parent=11 // pred_check_branch
          %157 = sbr.rel (%p155) target = $region16
        $region15: #{tpu_custom_call.1} parent=11 // pred_region
          %s159 = ssub.s32 7168, 7168
          %160 = vsyncadd [#allocation3], %s159
          %s161 = smul.addr %s25, 64
          %s162 = scalar_lea.hbm %s1, %s161
          %s163 = sshll.u32 [#allocation2], 4
          %s164 = int_to_ptr.vmem [resolvable:$true] %s163
          %169 = dma.hbm_to_vmem [thread:$0]  %s162, 7168, %s164, [#allocation3], 64, 64, 4
        $region16: #{tpu_custom_call.1} parent=11 // pred_fallthru
          _
        // Predicated region
        $region17: #{tpu_custom_call.1} parent=11 // pred_check
          %p170 = pneg %p110
        $region18: #{tpu_custom_call.1} parent=11 // pred_check_branch
          %172 = sbr.rel (%p170) target = $region20
        $region19: #{tpu_custom_call.1} parent=11 // pred_region
          %p173 = scmp.lt.s32.totalorder %s25, 0
          %s174 = scalar_select %p173, %s25, 0
          %s175 = scalar_lea.vmem %s2, %s174
        $region20: #{tpu_custom_call.1} parent=11 // pred_fallthru
          _
      $region12: #{tpu_custom_call.1} parent=5 // pred_fallthru
        _
      %p176 = scmp.lt.s32.totalorder %s13, 2
      // Predicated region
      $region21: #{tpu_custom_call.1} parent=5 // pred_check
        %p177 = pneg %p176
      $region22: #{tpu_custom_call.1} parent=5 // pred_check_branch
        %179 = sbr.rel (%p177) target = $region24
      $region23: #{tpu_custom_call.1} parent=5 // pred_region
        // Predicated region
        $region25: #{tpu_custom_call.1} parent=23 // pred_check
          %p180 = pneg %p52
        $region26: #{tpu_custom_call.1} parent=23 // pred_check_branch
          %182 = sbr.rel (%p180) target = $region28
        $region27: #{tpu_custom_call.1} parent=23 // pred_region
          %p183 = scmp.lt.s32.totalorder %s20, 1
          %s184 = scalar_select %p183, %s20, 1
          %s185 = smul.addr %s184, 3
          %s186 = smul.addr %s185, 4
          %s187 = scalar_lea.vmem %s0, %s186
        $region28: #{tpu_custom_call.1} parent=23 // pred_fallthru
          _
      $region24: #{tpu_custom_call.1} parent=5 // pred_fallthru
        _
      %p188 = scmp.le.s32.totalorder 1, %s13
      %p189 = scmp.lt.s32.totalorder %s13, 3
      %p190 = pnand %p188, %p189
      %p191 = pneg %p190
      // Predicated region
      $region29: #{tpu_custom_call.1} parent=5 // pred_check
        _
      $region30: #{tpu_custom_call.1} parent=5 // pred_check_branch
        %193 = sbr.rel (%p190) target = $region32
      $region31: #{tpu_custom_call.1} parent=5 // pred_region
        %s194 = ssub.s32 %s13, 1
        // Predicated region
        $region33: #{tpu_custom_call.1} parent=31 // pred_check
          %p195 = pneg %p84
        $region34: #{tpu_custom_call.1} parent=31 // pred_check_branch
          %197 = sbr.rel (%p195) target = $region36
        $region35: #{tpu_custom_call.1} parent=31 // pred_region
          %198 = dma.done [#allocation3], 7168
        $region36: #{tpu_custom_call.1} parent=31 // pred_fallthru
          _
        %p199 = scmp.lt.s32.totalorder %s23, 1
        %s200 = scalar_select %p199, %s23, 1
        %s201 = smul.addr %s200, 3
        %s202 = smul.addr %s201, 4
        %s203 = scalar_lea.vmem %s0, %s202
        %p204 = pneg %p58
        %p205 = pneg %p55
        %p206 = pneg %p84
        %p207 = pneg %p81
        %p208 = scmp.lt.s32.totalorder %s25, 0
        %s209 = scalar_select %p208, %s25, 0
        %s210 = scalar_lea.vmem %s2, %s209
        %p211 = pneg %p110
        %p212 = pneg %p107
        %p213 = pneg %p140
        %p214 = pneg %p137
        %s215 = sand.u32 %s127, 1
        %s216 = scalar_lea.sflag [#allocation4], %s215
        %s217 = sand.u32 %s127, 1
        %s218 = smul.addr %s217, 16
        %s219 = scalar_lea.vmem [#allocation5], %s218
        %p220 = scmp.lt.s32.totalorder %s23, 1
        %s221 = scalar_select %p220, %s23, 1
        %s222 = smul.addr %s221, 3
        %s223 = smul.addr %s222, 4
        %s224 = scalar_lea.vmem %s0, %s223
        %p225 = scmp.lt.s32.totalorder %s25, 0
        %s226 = scalar_select %p225, %s25, 0
        %s227 = scalar_lea.vmem %s2, %s226
        %s228 = smul.u32 2, %s24
        %v230 = vld [vmem:[%s224] sm:$0xf]
        %v231 = vld [vmem:[%s224 + $0x4] sm:$0xf]
        %v232 = vld [vmem:[%s224 + $0x8] sm:$0x7]
        %v235 = vunpack.c.l.b16 %v230
        %v236 = vunpack.c.l.b16 %v231
        %v237 = vpack.c.b16 %v236, %v235
        %v240 = vunpack.c.l.b16 %v232
        %v241 = vpack.c.b16 %v240, %v240
        %vm242 = vsmask.f32 7424
        %v244 = vshrl.u32 %v237, 16
        %v246 = vshll.u32 %v237, 16
        %v248 = vrot.slane %v246, 1
        %v249 = vor.u32 %v244, %v248
        %v251 = vshll.u32 %v241, 16
        %v253 = vrot.slane %v251, 1
        %v254 = vsel %vm242, %v249, %v253
        %vm256 = vcmask 1046528
        %v257 = vrot.slane %v237, 1
        %v258 = vrot.slane %v241, 1
        %v259 = vsel %vm256, %v257, %v258
        %vm261 = vsmask.f32 6400
        %v262 = vrot.slane %v244, 1
        %v263 = vrot.slane %v246, 2
        %v264 = vor.u32 %v262, %v263
        %v265 = vshrl.u32 %v241, 16
        %v267 = vrot.slane %v265, 1
        %v268 = vrot.slane %v251, 2
        %v269 = vor.u32 %v267, %v268
        %v270 = vsel %vm261, %v264, %v269
        %vm272 = vcmask 1045504
        %v273 = vrot.slane %v237, 2
        %v274 = vrot.slane %v241, 2
        %v275 = vsel %vm272, %v273, %v274
        %vm277 = vsmask.f32 5376
        %v278 = vrot.slane %v244, 2
        %v279 = vrot.slane %v246, 3
        %v280 = vor.u32 %v278, %v279
        %v281 = vrot.slane %v265, 2
        %v282 = vrot.slane %v251, 3
        %v283 = vor.u32 %v281, %v282
        %v284 = vsel %vm277, %v280, %v283
        %vm286 = vcmask 1044480
        %v287 = vrot.slane %v237, 3
        %v288 = vrot.slane %v241, 3
        %v289 = vsel %vm286, %v287, %v288
        %v291 = vld [vmem:[#allocation2] sm:$0xf]
        %v292 = vld [vmem:[#allocation2 + $0x4] sm:$0xf]
        %v293 = vld [vmem:[#allocation2 + $0x8] sm:$0xf]
        %v294 = vld [vmem:[#allocation2 + $0xc] sm:$0xf]
        %v295 = vld [vmem:[#allocation2 + $0x10] sm:$0xf]
        %v296 = vld [vmem:[#allocation2 + $0x14] sm:$0xf]
        %v297 = vld [vmem:[#allocation2 + $0x18] sm:$0xf]
        %v298 = vld [vmem:[#allocation2 + $0x1c] sm:$0xf]
        %v299 = vld [vmem:[#allocation2 + $0x20] sm:$0xf]
        %v300 = vld [vmem:[#allocation2 + $0x24] sm:$0xf]
        %v301 = vld [vmem:[#allocation2 + $0x28] sm:$0xf]
        %v302 = vld [vmem:[#allocation2 + $0x2c] sm:$0xf]
        %v303 = vld [vmem:[#allocation2 + $0x30] sm:$0xf]
        %v304 = vld [vmem:[#allocation2 + $0x34] sm:$0xf]
        %v305 = vld [vmem:[#allocation2 + $0x38] sm:$0xf]
        %v306 = vld [vmem:[#allocation2 + $0x3c] sm:$0xf]
        %v307 = vld [vmem:[#allocation2 + $0x40] sm:$0xf]
        %v308 = vld [vmem:[#allocation2 + $0x44] sm:$0xf]
        %v309 = vld [vmem:[#allocation2 + $0x48] sm:$0xf]
        %v310 = vld [vmem:[#allocation2 + $0x4c] sm:$0xf]
        %v311 = vld [vmem:[#allocation2 + $0x50] sm:$0xf]
        %v312 = vld [vmem:[#allocation2 + $0x54] sm:$0xf]
        %v313 = vld [vmem:[#allocation2 + $0x58] sm:$0xf]
        %v314 = vld [vmem:[#allocation2 + $0x5c] sm:$0xf]
        %v315 = vld [vmem:[#allocation2 + $0x60] sm:$0xf]
        %v316 = vld [vmem:[#allocation2 + $0x64] sm:$0xf]
        %v317 = vld [vmem:[#allocation2 + $0x68] sm:$0xf]
        %v318 = vld [vmem:[#allocation2 + $0x6c] sm:$0xf]
        %v319 = vld [vmem:[#allocation2 + $0x70] sm:$0xf]
        %v320 = vld [vmem:[#allocation2 + $0x74] sm:$0xf]
        %v321 = vld [vmem:[#allocation2 + $0x78] sm:$0xf]
        %v322 = vld [vmem:[#allocation2 + $0x7c] sm:$0xf]
        %v323 = vld [vmem:[#allocation2 + $0x80] sm:$0xf]
        %v324 = vld [vmem:[#allocation2 + $0x84] sm:$0xf]
        %v325 = vld [vmem:[#allocation2 + $0x88] sm:$0xf]
        %v326 = vld [vmem:[#allocation2 + $0x8c] sm:$0xf]
        %v327 = vld [vmem:[#allocation2 + $0x90] sm:$0xf]
        %v328 = vld [vmem:[#allocation2 + $0x94] sm:$0xf]
        %v329 = vld [vmem:[#allocation2 + $0x98] sm:$0xf]
        %v330 = vld [vmem:[#allocation2 + $0x9c] sm:$0xf]
        %v331 = vld [vmem:[#allocation2 + $0xa0] sm:$0xf]
        %v332 = vld [vmem:[#allocation2 + $0xa4] sm:$0xf]
        %v333 = vld [vmem:[#allocation2 + $0xa8] sm:$0xf]
        %v334 = vld [vmem:[#allocation2 + $0xac] sm:$0xf]
        %v335 = vld [vmem:[#allocation2 + $0xb0] sm:$0xf]
        %v336 = vld [vmem:[#allocation2 + $0xb4] sm:$0xf]
        %v337 = vld [vmem:[#allocation2 + $0xb8] sm:$0xf]
        %v338 = vld [vmem:[#allocation2 + $0xbc] sm:$0xf]
        %v339 = vld [vmem:[#allocation2 + $0xc0] sm:$0xf]
        %v340 = vld [vmem:[#allocation2 + $0xc4] sm:$0xf]
        %v341 = vld [vmem:[#allocation2 + $0xc8] sm:$0xf]
        %v342 = vld [vmem:[#allocation2 + $0xcc] sm:$0xf]
        %v343 = vld [vmem:[#allocation2 + $0xd0] sm:$0xf]
        %v344 = vld [vmem:[#allocation2 + $0xd4] sm:$0xf]
        %v345 = vld [vmem:[#allocation2 + $0xd8] sm:$0xf]
        %v346 = vld [vmem:[#allocation2 + $0xdc] sm:$0xf]
        %v347 = vld [vmem:[#allocation2 + $0xe0] sm:$0xf]
        %v348 = vld [vmem:[#allocation2 + $0xe4] sm:$0xf]
        %v349 = vld [vmem:[#allocation2 + $0xe8] sm:$0xf]
        %v350 = vld [vmem:[#allocation2 + $0xec] sm:$0xf]
        %v351 = vld [vmem:[#allocation2 + $0xf0] sm:$0xf]
        %v352 = vld [vmem:[#allocation2 + $0xf4] sm:$0xf]
        %v353 = vld [vmem:[#allocation2 + $0xf8] sm:$0xf]
        %v354 = vld [vmem:[#allocation2 + $0xfc] sm:$0xf]
        %v355 = vld [vmem:[#allocation2 + $0x100] sm:$0xf]
        %v356 = vld [vmem:[#allocation2 + $0x104] sm:$0xf]
        %v357 = vld [vmem:[#allocation2 + $0x108] sm:$0xf]
        %v358 = vld [vmem:[#allocation2 + $0x10c] sm:$0xf]
        %v359 = vld [vmem:[#allocation2 + $0x110] sm:$0xf]
        %v360 = vld [vmem:[#allocation2 + $0x114] sm:$0xf]
        %v361 = vld [vmem:[#allocation2 + $0x118] sm:$0xf]
        %v362 = vld [vmem:[#allocation2 + $0x11c] sm:$0xf]
        %v363 = vld [vmem:[#allocation2 + $0x120] sm:$0xf]
        %v364 = vld [vmem:[#allocation2 + $0x124] sm:$0xf]
        %v365 = vld [vmem:[#allocation2 + $0x128] sm:$0xf]
        %v366 = vld [vmem:[#allocation2 + $0x12c] sm:$0xf]
        %v367 = vld [vmem:[#allocation2 + $0x130] sm:$0xf]
        %v368 = vld [vmem:[#allocation2 + $0x134] sm:$0xf]
        %v369 = vld [vmem:[#allocation2 + $0x138] sm:$0xf]
        %v370 = vld [vmem:[#allocation2 + $0x13c] sm:$0xf]
        %v371 = vld [vmem:[#allocation2 + $0x140] sm:$0xf]
        %v372 = vld [vmem:[#allocation2 + $0x144] sm:$0xf]
        %v373 = vld [vmem:[#allocation2 + $0x148] sm:$0xf]
        %v374 = vld [vmem:[#allocation2 + $0x14c] sm:$0xf]
        %v375 = vld [vmem:[#allocation2 + $0x150] sm:$0xf]
        %v376 = vld [vmem:[#allocation2 + $0x154] sm:$0xf]
        %v377 = vld [vmem:[#allocation2 + $0x158] sm:$0xf]
        %v378 = vld [vmem:[#allocation2 + $0x15c] sm:$0xf]
        %v379 = vld [vmem:[#allocation2 + $0x160] sm:$0xf]
        %v380 = vld [vmem:[#allocation2 + $0x164] sm:$0xf]
        %v381 = vld [vmem:[#allocation2 + $0x168] sm:$0xf]
        %v382 = vld [vmem:[#allocation2 + $0x16c] sm:$0xf]
        %v383 = vld [vmem:[#allocation2 + $0x170] sm:$0xf]
        %v384 = vld [vmem:[#allocation2 + $0x174] sm:$0xf]
        %v385 = vld [vmem:[#allocation2 + $0x178] sm:$0xf]
        %v386 = vld [vmem:[#allocation2 + $0x17c] sm:$0xf]
        %v387 = vld [vmem:[#allocation2 + $0x180] sm:$0xf]
        %v388 = vld [vmem:[#allocation2 + $0x184] sm:$0xf]
        %v389 = vld [vmem:[#allocation2 + $0x188] sm:$0xf]
        %v390 = vld [vmem:[#allocation2 + $0x18c] sm:$0xf]
        %v391 = vld [vmem:[#allocation2 + $0x190] sm:$0xf]
        %v392 = vld [vmem:[#allocation2 + $0x194] sm:$0xf]
        %v393 = vld [vmem:[#allocation2 + $0x198] sm:$0xf]
        %v394 = vld [vmem:[#allocation2 + $0x19c] sm:$0xf]
        %v395 = vld [vmem:[#allocation2 + $0x1a0] sm:$0xf]
        %v396 = vld [vmem:[#allocation2 + $0x1a4] sm:$0xf]
        %v397 = vld [vmem:[#allocation2 + $0x1a8] sm:$0xf]
        %v398 = vld [vmem:[#allocation2 + $0x1ac] sm:$0xf]
        %v399 = vld [vmem:[#allocation2 + $0x1b0] sm:$0xf]
        %v400 = vld [vmem:[#allocation2 + $0x1b4] sm:$0xf]
        %v401 = vld [vmem:[#allocation2 + $0x1b8] sm:$0xf]
        %v402 = vld [vmem:[#allocation2 + $0x1bc] sm:$0xf]
        %v403 = vld [vmem:[%s227] sm:$0x1]
        %v405 = vlaneseq
        %v406 = vshrl.u32 %v405, 7
        %v407 = vsub.s32 0, %v406
        %v408 = vrot.slane %v403, %v407
        %v522 = vunpack.c.l.b16 %v291
        %v523 = vunpack.c.l.b16 %v292
        %v524 = vunpack.c.l.b16 %v293
        %v525 = vunpack.c.l.b16 %v294
        %v526 = vunpack.c.l.b16 %v295
        %v527 = vunpack.c.l.b16 %v296
        %v528 = vunpack.c.l.b16 %v297
        %v529 = vunpack.c.l.b16 %v298
        %v530 = vunpack.c.l.b16 %v299
        %v531 = vunpack.c.l.b16 %v300
        %v532 = vunpack.c.l.b16 %v301
        %v533 = vunpack.c.l.b16 %v302
        %v534 = vunpack.c.l.b16 %v303
        %v535 = vunpack.c.l.b16 %v304
        %v536 = vunpack.c.l.b16 %v305
        %v537 = vunpack.c.l.b16 %v306
        %v538 = vunpack.c.l.b16 %v307
        %v539 = vunpack.c.l.b16 %v308
        %v540 = vunpack.c.l.b16 %v309
        %v541 = vunpack.c.l.b16 %v310
        %v542 = vunpack.c.l.b16 %v311
        %v543 = vunpack.c.l.b16 %v312
        %v544 = vunpack.c.l.b16 %v313
        %v545 = vunpack.c.l.b16 %v314
        %v546 = vunpack.c.l.b16 %v315
        %v547 = vunpack.c.l.b16 %v316
        %v548 = vunpack.c.l.b16 %v317
        %v549 = vunpack.c.l.b16 %v318
        %v550 = vunpack.c.l.b16 %v319
        %v551 = vunpack.c.l.b16 %v320
        %v552 = vunpack.c.l.b16 %v321
        %v553 = vunpack.c.l.b16 %v322
        %v554 = vunpack.c.l.b16 %v323
        %v555 = vunpack.c.l.b16 %v324
        %v556 = vunpack.c.l.b16 %v325
        %v557 = vunpack.c.l.b16 %v326
        %v558 = vunpack.c.l.b16 %v327
        %v559 = vunpack.c.l.b16 %v328
        %v560 = vunpack.c.l.b16 %v329
        %v561 = vunpack.c.l.b16 %v330
        %v562 = vunpack.c.l.b16 %v331
        %v563 = vunpack.c.l.b16 %v332
        %v564 = vunpack.c.l.b16 %v333
        %v565 = vunpack.c.l.b16 %v334
        %v566 = vunpack.c.l.b16 %v335
        %v567 = vunpack.c.l.b16 %v336
        %v568 = vunpack.c.l.b16 %v337
        %v569 = vunpack.c.l.b16 %v338
        %v570 = vunpack.c.l.b16 %v339
        %v571 = vunpack.c.l.b16 %v340
        %v572 = vunpack.c.l.b16 %v341
        %v573 = vunpack.c.l.b16 %v342
        %v574 = vunpack.c.l.b16 %v343
        %v575 = vunpack.c.l.b16 %v344
        %v576 = vunpack.c.l.b16 %v345
        %v577 = vunpack.c.l.b16 %v346
        %v578 = vunpack.c.l.b16 %v347
        %v579 = vunpack.c.l.b16 %v348
        %v580 = vunpack.c.l.b16 %v349
        %v581 = vunpack.c.l.b16 %v350
        %v582 = vunpack.c.l.b16 %v351
        %v583 = vunpack.c.l.b16 %v352
        %v584 = vunpack.c.l.b16 %v353
        %v585 = vunpack.c.l.b16 %v354
        %v586 = vunpack.c.l.b16 %v355
        %v587 = vunpack.c.l.b16 %v356
        %v588 = vunpack.c.l.b16 %v357
        %v589 = vunpack.c.l.b16 %v358
        %v590 = vunpack.c.l.b16 %v359
        %v591 = vunpack.c.l.b16 %v360
        %v592 = vunpack.c.l.b16 %v361
        %v593 = vunpack.c.l.b16 %v362
        %v594 = vunpack.c.l.b16 %v363
        %v595 = vunpack.c.l.b16 %v364
        %v596 = vunpack.c.l.b16 %v365
        %v597 = vunpack.c.l.b16 %v366
        %v598 = vunpack.c.l.b16 %v367
        %v599 = vunpack.c.l.b16 %v368
        %v600 = vunpack.c.l.b16 %v369
        %v601 = vunpack.c.l.b16 %v370
        %v602 = vunpack.c.l.b16 %v371
        %v603 = vunpack.c.l.b16 %v372
        %v604 = vunpack.c.l.b16 %v373
        %v605 = vunpack.c.l.b16 %v374
        %v606 = vunpack.c.l.b16 %v375
        %v607 = vunpack.c.l.b16 %v376
        %v608 = vunpack.c.l.b16 %v377
        %v609 = vunpack.c.l.b16 %v378
        %v610 = vunpack.c.l.b16 %v379
        %v611 = vunpack.c.l.b16 %v380
        %v612 = vunpack.c.l.b16 %v381
        %v613 = vunpack.c.l.b16 %v382
        %v614 = vunpack.c.l.b16 %v383
        %v615 = vunpack.c.l.b16 %v384
        %v616 = vunpack.c.l.b16 %v385
        %v617 = vunpack.c.l.b16 %v386
        %v618 = vunpack.c.l.b16 %v387
        %v619 = vunpack.c.l.b16 %v388
        %v620 = vunpack.c.l.b16 %v389
        %v621 = vunpack.c.l.b16 %v390
        %v622 = vunpack.c.l.b16 %v391
        %v623 = vunpack.c.l.b16 %v392
        %v624 = vunpack.c.l.b16 %v393
        %v625 = vunpack.c.l.b16 %v394
        %v626 = vunpack.c.l.b16 %v395
        %v627 = vunpack.c.l.b16 %v396
        %v628 = vunpack.c.l.b16 %v397
        %v629 = vunpack.c.l.b16 %v398
        %v630 = vunpack.c.l.b16 %v399
        %v631 = vunpack.c.l.b16 %v400
        %v632 = vunpack.c.l.b16 %v401
        %v633 = vunpack.c.l.b16 %v402
        %v634 = vpack.c.b16 %v523, %v522
        %v635 = vpack.c.b16 %v525, %v524
        %v636 = vpack.c.b16 %v527, %v526
        %v637 = vpack.c.b16 %v529, %v528
        %v638 = vpack.c.b16 %v531, %v530
        %v639 = vpack.c.b16 %v533, %v532
        %v640 = vpack.c.b16 %v535, %v534
        %v641 = vpack.c.b16 %v537, %v536
        %v642 = vpack.c.b16 %v539, %v538
        %v643 = vpack.c.b16 %v541, %v540
        %v644 = vpack.c.b16 %v543, %v542
        %v645 = vpack.c.b16 %v545, %v544
        %v646 = vpack.c.b16 %v547, %v546
        %v647 = vpack.c.b16 %v549, %v548
        %v648 = vpack.c.b16 %v551, %v550
        %v649 = vpack.c.b16 %v553, %v552
        %v650 = vpack.c.b16 %v555, %v554
        %v651 = vpack.c.b16 %v557, %v556
        %v652 = vpack.c.b16 %v559, %v558
        %v653 = vpack.c.b16 %v561, %v560
        %v654 = vpack.c.b16 %v563, %v562
        %v655 = vpack.c.b16 %v565, %v564
        %v656 = vpack.c.b16 %v567, %v566
        %v657 = vpack.c.b16 %v569, %v568
        %v658 = vpack.c.b16 %v571, %v570
        %v659 = vpack.c.b16 %v573, %v572
        %v660 = vpack.c.b16 %v575, %v574
        %v661 = vpack.c.b16 %v577, %v576
        %v662 = vpack.c.b16 %v579, %v578
        %v663 = vpack.c.b16 %v581, %v580
        %v664 = vpack.c.b16 %v583, %v582
        %v665 = vpack.c.b16 %v585, %v584
        %v666 = vpack.c.b16 %v587, %v586
        %v667 = vpack.c.b16 %v589, %v588
        %v668 = vpack.c.b16 %v591, %v590
        %v669 = vpack.c.b16 %v593, %v592
        %v670 = vpack.c.b16 %v595, %v594
        %v671 = vpack.c.b16 %v597, %v596
        %v672 = vpack.c.b16 %v599, %v598
        %v673 = vpack.c.b16 %v601, %v600
        %v674 = vpack.c.b16 %v603, %v602
        %v675 = vpack.c.b16 %v605, %v604
        %v676 = vpack.c.b16 %v607, %v606
        %v677 = vpack.c.b16 %v609, %v608
        %v678 = vpack.c.b16 %v611, %v610
        %v679 = vpack.c.b16 %v613, %v612
        %v680 = vpack.c.b16 %v615, %v614
        %v681 = vpack.c.b16 %v617, %v616
        %v682 = vpack.c.b16 %v619, %v618
        %v683 = vpack.c.b16 %v621, %v620
        %v684 = vpack.c.b16 %v623, %v622
        %v685 = vpack.c.b16 %v625, %v624
        %v686 = vpack.c.b16 %v627, %v626
        %v687 = vpack.c.b16 %v629, %v628
        %v688 = vpack.c.b16 %v631, %v630
        %v689 = vpack.c.b16 %v633, %v632
        %746 = vmatprep.subr.bf16.mxu0 0
        %747 = vmatpush1.bf16.msra.mxu0 %v634
        %748 = vmatprep.subr.bf16.mxu0 0
        %749 = vmatpush1.bf16.msra.mxu0 %v635
        %750 = vmatprep.subr.bf16.mxu0 0
        %751 = vmatpush1.bf16.msra.mxu0 %v636
        %752 = vmatprep.subr.bf16.mxu0 0
        %753 = vmatpush1.bf16.msra.mxu0 %v637
        %754 = vmatprep.subr.bf16.mxu0 0
        %755 = vmatpush1.bf16.msra.mxu0 %v638
        %756 = vmatprep.subr.bf16.mxu0 0
        %757 = vmatpush1.bf16.msra.mxu0 %v639
        %758 = vmatprep.subr.bf16.mxu0 0
        %759 = vmatpush1.bf16.msra.mxu0 %v640
        %760 = vmatprep.subr.bf16.mxu0 0
        %761 = vmatpush1.bf16.msra.mxu0 %v641
        %762 = vmatprep.subr.bf16.mxu0 0
        %763 = vmatpush1.bf16.msra.mxu0 %v642
        %764 = vmatprep.subr.bf16.mxu0 0
        %765 = vmatpush1.bf16.msra.mxu0 %v643
        %766 = vmatprep.subr.bf16.mxu0 0
        %767 = vmatpush1.bf16.msra.mxu0 %v644
        %768 = vmatprep.subr.bf16.mxu0 0
        %769 = vmatpush1.bf16.msra.mxu0 %v645
        %770 = vmatprep.subr.bf16.mxu0 0
        %771 = vmatpush1.bf16.msra.mxu0 %v646
        %772 = vmatprep.subr.bf16.mxu0 0
        %773 = vmatpush1.bf16.msra.mxu0 %v647
        %774 = vmatprep.subr.bf16.mxu0 0
        %775 = vmatpush1.bf16.msra.mxu0 %v648
        %776 = vmatprep.subr.bf16.mxu0 0
        %777 = vmatpush1.bf16.msra.mxu0 %v649
        %778 = vmatprep.mubr.bf16.mxu0 %v254
        %779 = vmatmul.mubr.bf16.gmra.mrb[0].mxu0 %v237
        %v780 = vpop.f32.mrb[0].mxu0
        %v781 = vadd.f32 %v408, %v780
        %v782 = vpop.f32.mrb[0].mxu0
        %v783 = vpop.f32.mrb[0].mxu0
        %v784 = vadd.f32 %v408, %v783
        %v785 = vpop.f32.mrb[0].mxu0
        %786 = vdwg.mxu0
        %787 = vmatprep.subr.bf16.mxu0 0
        %788 = vmatpush1.bf16.msra.mxu0 %v650
        %789 = vmatprep.subr.bf16.mxu0 0
        %790 = vmatpush1.bf16.msra.mxu0 %v651
        %791 = vmatprep.subr.bf16.mxu0 0
        %792 = vmatpush1.bf16.msra.mxu0 %v652
        %793 = vmatprep.subr.bf16.mxu0 0
        %794 = vmatpush1.bf16.msra.mxu0 %v653
        %795 = vmatprep.subr.bf16.mxu0 0
        %796 = vmatpush1.bf16.msra.mxu0 %v654
        %797 = vmatprep.subr.bf16.mxu0 0
        %798 = vmatpush1.bf16.msra.mxu0 %v655
        %799 = vmatprep.subr.bf16.mxu0 0
        %800 = vmatpush1.bf16.msra.mxu0 %v656
        %801 = vmatprep.subr.bf16.mxu0 0
        %802 = vmatpush1.bf16.msra.mxu0 %v657
        %803 = vmatprep.subr.bf16.mxu0 0
        %804 = vmatpush1.bf16.msra.mxu0 %v658
        %805 = vmatprep.subr.bf16.mxu0 0
        %806 = vmatpush1.bf16.msra.mxu0 %v659
        %807 = vmatprep.subr.bf16.mxu0 0
        %808 = vmatpush1.bf16.msra.mxu0 %v660
        %809 = vmatprep.subr.bf16.mxu0 0
        %810 = vmatpush1.bf16.msra.mxu0 %v661
        %811 = vmatprep.subr.bf16.mxu0 0
        %812 = vmatpush1.bf16.msra.mxu0 %v662
        %813 = vmatprep.subr.bf16.mxu0 0
        %814 = vmatpush1.bf16.msra.mxu0 %v663
        %815 = vmatprep.subr.bf16.mxu0 0
        %816 = vmatpush1.bf16.msra.mxu0 %v664
        %817 = vmatprep.subr.bf16.mxu0 0
        %818 = vmatpush1.bf16.msra.mxu0 %v665
        %819 = vmatprep.mubr.bf16.mxu0 %v270
        %820 = vmatmul.mubr.bf16.gmra.mrb[0].mxu0 %v259
        %v821 = vpop.f32.mrb[0].mxu0
        %v822 = vadd.f32 %v781, %v821
        %v823 = vpop.f32.mrb[0].mxu0
        %v824 = vpop.f32.mrb[0].mxu0
        %v825 = vadd.f32 %v784, %v824
        %v826 = vpop.f32.mrb[0].mxu0
        %827 = vdwg.mxu0
        %828 = vmatprep.subr.bf16.mxu0 0
        %829 = vmatpush1.bf16.msra.mxu0 %v666
        %830 = vmatprep.subr.bf16.mxu0 0
        %831 = vmatpush1.bf16.msra.mxu0 %v667
        %832 = vmatprep.subr.bf16.mxu0 0
        %833 = vmatpush1.bf16.msra.mxu0 %v668
        %834 = vmatprep.subr.bf16.mxu0 0
        %835 = vmatpush1.bf16.msra.mxu0 %v669
        %836 = vmatprep.subr.bf16.mxu0 0
        %837 = vmatpush1.bf16.msra.mxu0 %v670
        %838 = vmatprep.subr.bf16.mxu0 0
        %839 = vmatpush1.bf16.msra.mxu0 %v671
        %840 = vmatprep.subr.bf16.mxu0 0
        %841 = vmatpush1.bf16.msra.mxu0 %v672
        %842 = vmatprep.subr.bf16.mxu0 0
        %843 = vmatpush1.bf16.msra.mxu0 %v673
        %844 = vmatprep.subr.bf16.mxu0 0
        %845 = vmatpush1.bf16.msra.mxu0 %v674
        %846 = vmatprep.subr.bf16.mxu0 0
        %847 = vmatpush1.bf16.msra.mxu0 %v675
        %848 = vmatprep.subr.bf16.mxu0 0
        %849 = vmatpush1.bf16.msra.mxu0 %v676
        %850 = vmatprep.subr.bf16.mxu0 0
        %851 = vmatpush1.bf16.msra.mxu0 %v677
        %852 = vmatprep.subr.bf16.mxu0 0
        %853 = vmatpush1.bf16.msra.mxu0 %v678
        %854 = vmatprep.subr.bf16.mxu0 0
        %855 = vmatpush1.bf16.msra.mxu0 %v679
        %856 = vmatprep.subr.bf16.mxu0 0
        %857 = vmatpush1.bf16.msra.mxu0 %v680
        %858 = vmatprep.subr.bf16.mxu0 0
        %859 = vmatpush1.bf16.msra.mxu0 %v681
        %860 = vmatprep.mubr.bf16.mxu0 %v284
        %861 = vmatmul.mubr.bf16.gmra.mrb[0].mxu0 %v275
        %v862 = vpop.f32.mrb[0].mxu0
        %v863 = vadd.f32 %v822, %v862
        %v864 = vpop.f32.mrb[0].mxu0
        %v865 = vpop.f32.mrb[0].mxu0
        %v866 = vadd.f32 %v825, %v865
        %v867 = vpop.f32.mrb[0].mxu0
        %868 = vdwg.mxu0
        %869 = vmatprep.subr.bf16.mxu0 0
        %870 = vmatpush1.bf16.msra.mxu0 %v682
        %871 = vmatprep.subr.bf16.mxu0 0
        %872 = vmatpush1.bf16.msra.mxu0 %v683
        %873 = vmatprep.subr.bf16.mxu0 0
        %874 = vmatpush1.bf16.msra.mxu0 %v684
        %875 = vmatprep.subr.bf16.mxu0 0
        %876 = vmatpush1.bf16.msra.mxu0 %v685
        %877 = vmatprep.subr.bf16.mxu0 0
        %878 = vmatpush1.bf16.msra.mxu0 %v686
        %879 = vmatprep.subr.bf16.mxu0 0
        %880 = vmatpush1.bf16.msra.mxu0 %v687
        %881 = vmatprep.subr.bf16.mxu0 0
        %882 = vmatpush1.bf16.msra.mxu0 %v688
        %883 = vmatprep.subr.bf16.mxu0 0
        %884 = vmatpush1.bf16.msra.mxu0 %v689
        %885 = vmatprep.subr.bf16.mxu0 0
        %886 = vmatpush1.bf16.msra.mxu0 0
        %887 = vmatprep.subr.bf16.mxu0 0
        %888 = vmatpush1.bf16.msra.mxu0 0
        %889 = vmatprep.subr.bf16.mxu0 0
        %890 = vmatpush1.bf16.msra.mxu0 0
        %891 = vmatprep.subr.bf16.mxu0 0
        %892 = vmatpush1.bf16.msra.mxu0 0
        %893 = vmatprep.subr.bf16.mxu0 0
        %894 = vmatpush1.bf16.msra.mxu0 0
        %895 = vmatprep.subr.bf16.mxu0 0
        %896 = vmatpush1.bf16.msra.mxu0 0
        %897 = vmatprep.subr.bf16.mxu0 0
        %898 = vmatpush1.bf16.msra.mxu0 0
        %899 = vmatprep.subr.bf16.mxu0 0
        %900 = vmatpush1.bf16.msra.mxu0 0
        %901 = vmatprep.mubr.bf16.mxu0 0
        %902 = vmatmul.mubr.bf16.gmra.mrb[0].mxu0 %v289
        %v903 = vpop.f32.mrb[0].mxu0
        %v904 = vadd.f32 %v863, %v903
        %v905 = vpop.f32.mrb[0].mxu0
        %v906 = vpop.f32.mrb[0].mxu0
        %v907 = vadd.f32 %v866, %v906
        %v908 = vpop.f32.mrb[0].mxu0
        %909 = vdwg.mxu0
        %910 = vst [vmem:[%s219] sm:$0xff] %v904
        %911 = vst [vmem:[%s219 + $0x8] sm:$0xff] %v907
        %s912 = sand.u32 %s127, 1
        %s913 = scalar_lea.sflag [#allocation4], %s912
        %s914 = sand.u32 %s127, 1
        %s915 = smul.addr %s914, 16
        %s916 = scalar_lea.vmem [#allocation5], %s915
        // Predicated region
        $region37: #{tpu_custom_call.1} parent=31 // pred_check
          %p917 = pneg %p137
        $region38: #{tpu_custom_call.1} parent=31 // pred_check_branch
          %919 = sbr.rel (%p917) target = $region40
        $region39: #{tpu_custom_call.1} parent=31 // pred_region
          %s920 = smul.u32 2, %s24
          %s922 = ssub.s32 256, 256
          %923 = vsyncadd %s913, %s922
          %s924 = sadd.s32 %s25, %s920
          %s925 = smul.addr %s23, 2
          %s926 = sadd.s32 %s924, %s925
          %s927 = smul.addr %s926, 128
          %s928 = scalar_lea.hbm %s3, %s927
          %s929 = sshll.u32 %s916, 4
          %s930 = int_to_ptr.vmem [resolvable:$true] %s929
          %935 = dma.vmem_to_hbm [thread:$0]  %s930, 256, %s928, %s913, 128, 128, 8
        $region40: #{tpu_custom_call.1} parent=31 // pred_fallthru
          _
      $region32: #{tpu_custom_call.1} parent=5 // pred_fallthru
        _
      %p936 = scmp.le.s32.totalorder 2, %s13
      // Predicated region
      $region41: #{tpu_custom_call.1} parent=5 // pred_check
        %p937 = pneg %p936
      $region42: #{tpu_custom_call.1} parent=5 // pred_check_branch
        %939 = sbr.rel (%p937) target = $region44
      $region43: #{tpu_custom_call.1} parent=5 // pred_region
        %s940 = ssub.s32 %s13, 2
        // Predicated region
        $region45: #{tpu_custom_call.1} parent=43 // pred_check
          %p941 = pneg %p143
        $region46: #{tpu_custom_call.1} parent=43 // pred_check_branch
          %943 = sbr.rel (%p941) target = $region48
        $region47: #{tpu_custom_call.1} parent=43 // pred_region
          %s944 = sand.u32 %s128, 1
          %s945 = scalar_lea.sflag [#allocation4], %s944
          %s946 = sand.u32 %s128, 1
          %s947 = smul.addr %s946, 16
          %s948 = scalar_lea.vmem [#allocation5], %s947
          %949 = dma.done %s945, 256
        $region48: #{tpu_custom_call.1} parent=43 // pred_fallthru
          _
      $region44: #{tpu_custom_call.1} parent=5 // pred_fallthru
        _
    $region6: #{tpu_custom_call.1} parent=1 // loop_footer
      %s17 = sadd.s32 1, %s13
    $region7: #{tpu_custom_call.1} parent=1 // loop_footer_branch
      %12 = sbr.rel target = $region3
    $region8: #{tpu_custom_call.1} parent=1 // loop_exit
      _
    %950 = vsyncpa [#allocation3], 1
    %s951 = scalar_lea.sflag [#allocation3], 1
    %952 = vsyncpa %s951, 1
    %953 = vsyncpa [#allocation4], 1
    %s954 = scalar_lea.sflag [#allocation4], 1
    %955 = vsyncpa %s954, 1

// kernel: tpu_custom_call.1
$region0: #{tpu_custom_call.1}
  #allocation0 [shape = 'u32[]', space=smem, size = 0x4, offset = 0x4, fixed_abs, tag = 'smem constant byte address 0x4 - core index']
  #allocation1 [shape = 'u32[144,128]{1,0:T(1,128)}', space=vmem, size = 0x12000, scoped, tag = 'internal scratch']
  %s0 = inlined_call_operand.vmem [shape: bf16[2,22,128], index: 0, kind: input, shape index: {}]
  %s1 = inlined_call_operand.hbm [shape: bf16[896,128], index: 1, kind: input, shape index: {}]
  %s2 = inlined_call_operand.vmem [shape: f32[1,128], index: 2, kind: input, shape index: {}]
  %s3 = inlined_call_operand.hbm [shape: f32[2,16,128], index: 3, kind: output, shape index: {}]
  %s4 = sld [smem:[#allocation0]]
  $region49: #{tpu_custom_call.1} parent=0
    _
  %s6 = ssub.s32 1, %s4
  %s7 = scalar_select 0, %s6, %s4
  $region1: #{tpu_custom_call.1} parent=0
    #allocation2 [shape = 'u8[229376]{0}', space=vmem, size = 0x38000, scoped, tag = 'input window, operand 1, single buffered']
    #allocation3 [shape = 's32[2]{0}', space=sflag, size = 0x8, scoped, tag = 'scoped memory for tpu_custom_call.1']
    #allocation4 [shape = 's32[2]{0}', space=sflag, size = 0x8, scoped, tag = 'scoped memory for tpu_custom_call.1']
    #allocation5 [shape = 'u8[16384]{0}', space=vmem, size = 0x4000, scoped, tag = 'output window, operand 0']
    %8 = vsyncpa [#allocation3], 0
    %9 = vsyncpa [#allocation4], 0
    %s10 = scalar_lea.sflag [#allocation4], 1
    %11 = vsyncpa %s10, 0
    loop: start=0, step=1, limit=4
    $region2: #{tpu_custom_call.1} parent=1 // loop_pre_header
      _
    $region3: #{tpu_custom_call.1} parent=1 // loop_header
      %s13 = sphi 0, %s17
      %p14 = scmp.ge.s32.totalorder %s13, 4
      %s20 = sphi 0, %s39
      %s21 = sphi 0, %s35
      %s22 = sphi 0, %s31
      %s23 = sphi 0, %s20
      %s24 = sphi 0, %s21
      %s25 = sphi 0, %s22
      %s26 = sphi 0, %s23
      %s27 = sphi 0, %s24
      %s28 = sphi 0, %s25
      %s42 = sphi 0, %s44
      %s45 = sphi 0, %s42
      %s46 = sphi 0, %s45
      %s62 = sphi 0, %s46
      %s68 = sphi 0, %s70
      %s71 = sphi 0, %s68
      %s72 = sphi 0, %s71
      %s88 = sphi 0, %s72
      %s94 = sphi 0, %s96
      %s97 = sphi 0, %s94
      %s98 = sphi 0, %s97
      %s114 = sphi 0, %s98
      %s124 = sphi 0, %s126
      %s127 = sphi 0, %s124
      %s128 = sphi 0, %s127
      %s144 = sphi 0, %s128
    $region4: #{tpu_custom_call.1} parent=1 // loop_header_branch
      %16 = sbr.rel (%p14) target = $region8
    $region5: #{tpu_custom_call.1} parent=1 // loop_body
      %s18 = ssub.s32 %s13, 1
      %s19 = ssub.s32 %s13, 2
      %s29 = sadd.s32 1, %s22
      %p30 = scmp.ge.s32.totalorder %s29, 1
      %s31 = scalar_select %p30, 0, %s29
      %s32 = sadd.s32 1, %s21
      %s33 = scalar_select %p30, %s32, %s21
      %p34 = scmp.ge.s32.totalorder %s33, 1
      %s35 = scalar_select %p34, 0, %s33
      %s36 = sadd.s32 1, %s20
      %s37 = scalar_select %p34, %s36, %s20
      %p38 = scmp.ge.s32.totalorder %s37, 2
      %s39 = scalar_select %p38, 0, %s37
      %s40 = ssub.s32 %s20, %s39
      %p41 = scmp.eq.s32.totalorder %s40, 0
      %s43 = sadd.s32 %s42, 1
      %s44 = scalar_select %p41, %s42, %s43
      %p47 = pneg %p41
      %p48 = scmp.eq.s32.totalorder %s13, 1
      %p49 = por %p47, %p48
      %p50 = scmp.ne.s32.totalorder %s42, %s45
      %p51 = scmp.eq.s32.totalorder %s13, 0
      %p52 = por %p50, %p51
      %p53 = scmp.ne.s32.totalorder %s42, %s45
      %p54 = scmp.eq.s32.totalorder %s18, 1
      %p55 = por %p53, %p54
      %p56 = scmp.ne.s32.totalorder %s45, %s46
      %p57 = scmp.eq.s32.totalorder %s18, 0
      %p58 = por %p56, %p57
      %p59 = scmp.ne.s32.totalorder %s45, %s46
      %p60 = scmp.eq.s32.totalorder %s19, 1
      %p61 = por %p59, %p60
      %p63 = scmp.ne.s32.totalorder %s46, %s62
      %p64 = scmp.eq.s32.totalorder %s19, 0
      %p65 = por %p63, %p64
      %s66 = ssub.s32 %s22, %s31
      %p67 = scmp.eq.s32.totalorder %s66, 0
      %s69 = sadd.s32 %s68, 1
      %s70 = scalar_select %p67, %s68, %s69
      %p73 = pneg %p67
      %p74 = scmp.eq.s32.totalorder %s13, 1
      %p75 = por %p73, %p74
      %p76 = scmp.ne.s32.totalorder %s68, %s71
      %p77 = scmp.eq.s32.totalorder %s13, 0
      %p78 = por %p76, %p77
      %p79 = scmp.ne.s32.totalorder %s68, %s71
      %p80 = scmp.eq.s32.totalorder %s18, 1
      %p81 = por %p79, %p80
      %p82 = scmp.ne.s32.totalorder %s71, %s72
      %p83 = scmp.eq.s32.totalorder %s18, 0
      %p84 = por %p82, %p83
      %p85 = scmp.ne.s32.totalorder %s71, %s72
      %p86 = scmp.eq.s32.totalorder %s19, 1
      %p87 = por %p85, %p86
      %p89 = scmp.ne.s32.totalorder %s72, %s88
      %p90 = scmp.eq.s32.totalorder %s19, 0
      %p91 = por %p89, %p90
      %s92 = ssub.s32 %s22, %s31
      %p93 = scmp.eq.s32.totalorder %s92, 0
      %s95 = sadd.s32 %s94, 1
      %s96 = scalar_select %p93, %s94, %s95
      %p99 = pneg %p93
      %p100 = scmp.eq.s32.totalorder %s13, 1
      %p101 = por %p99, %p100
      %p102 = scmp.ne.s32.totalorder %s94, %s97
      %p103 = scmp.eq.s32.totalorder %s13, 0
      %p104 = por %p102, %p103
      %p105 = scmp.ne.s32.totalorder %s94, %s97
      %p106 = scmp.eq.s32.totalorder %s18, 1
      %p107 = por %p105, %p106
      %p108 = scmp.ne.s32.totalorder %s97, %s98
      %p109 = scmp.eq.s32.totalorder %s18, 0
      %p110 = por %p108, %p109
      %p111 = scmp.ne.s32.totalorder %s97, %s98
      %p112 = scmp.eq.s32.totalorder %s19, 1
      %p113 = por %p111, %p112
      %p115 = scmp.ne.s32.totalorder %s98, %s114
      %p116 = scmp.eq.s32.totalorder %s19, 0
      %p117 = por %p115, %p116
      %s118 = ssub.s32 %s20, %s39
      %s119 = ssub.s32 %s21, %s35
      %s120 = sor.u32 %s118, %s119
      %s121 = ssub.s32 %s22, %s31
      %s122 = sor.u32 %s120, %s121
      %p123 = scmp.eq.s32.totalorder %s122, 0
      %s125 = sadd.s32 %s124, 1
      %s126 = scalar_select %p123, %s124, %s125
      %p129 = pneg %p123
      %p130 = scmp.eq.s32.totalorder %s13, 1
      %p131 = por %p129, %p130
      %p132 = scmp.ne.s32.totalorder %s124, %s127
      %p133 = scmp.eq.s32.totalorder %s13, 0
      %p134 = por %p132, %p133
      %p135 = scmp.ne.s32.totalorder %s124, %s127
      %p136 = scmp.eq.s32.totalorder %s18, 1
      %p137 = por %p135, %p136
      %p138 = scmp.ne.s32.totalorder %s127, %s128
      %p139 = scmp.eq.s32.totalorder %s18, 0
      %p140 = por %p138, %p139
      %p141 = scmp.ne.s32.totalorder %s127, %s128
      %p142 = scmp.eq.s32.totalorder %s19, 1
      %p143 = por %p141, %p142
      %p145 = scmp.ne.s32.totalorder %s128, %s144
      %p146 = scmp.eq.s32.totalorder %s19, 0
      %p147 = por %p145, %p146
      %p148 = scmp.le.s32.totalorder 1, %s13
      %p149 = scmp.lt.s32.totalorder %s13, 3
      %p150 = pnand %p148, %p149
      %p151 = pneg %p150
      // Predicated region
      $region9: #{tpu_custom_call.1} parent=5 // pred_check
        _
      $region10: #{tpu_custom_call.1} parent=5 // pred_check_branch
        %153 = sbr.rel (%p150) target = $region12
      $region11: #{tpu_custom_call.1} parent=5 // pred_region
        %s154 = ssub.s32 %s13, 1
        // Predicated region
        $region13: #{tpu_custom_call.1} parent=11 // pred_check
          %p155 = pneg %p84
        $region14: #{tpu_custom_call.1} parent=11 // pred_check_branch
          %157 = sbr.rel (%p155) target = $region16
        $region15: #{tpu_custom_call.1} parent=11 // pred_region
          %s159 = ssub.s32 7168, 7168
          %160 = vsyncadd [#allocation3], %s159
          %s161 = smul.addr %s25, 64
          %s162 = scalar_lea.hbm %s1, %s161
          %s163 = sshll.u32 [#allocation2], 4
          %s164 = int_to_ptr.vmem [resolvable:$true] %s163
          %169 = dma.hbm_to_vmem [thread:$0]  %s162, 7168, %s164, [#allocation3], 64, 64, 4
        $region16: #{tpu_custom_call.1} parent=11 // pred_fallthru
          _
        // Predicated region
        $region17: #{tpu_custom_call.1} parent=11 // pred_check
          %p170 = pneg %p110
        $region18: #{tpu_custom_call.1} parent=11 // pred_check_branch
          %172 = sbr.rel (%p170) target = $region20
        $region19: #{tpu_custom_call.1} parent=11 // pred_region
          %p173 = scmp.lt.s32.totalorder %s25, 0
          %s174 = scalar_select %p173, %s25, 0
          %s175 = scalar_lea.vmem %s2, %s174
        $region20: #{tpu_custom_call.1} parent=11 // pred_fallthru
          _
      $region12: #{tpu_custom_call.1} parent=5 // pred_fallthru
        _
      %p176 = scmp.lt.s32.totalorder %s13, 2
      // Predicated region
      $region21: #{tpu_custom_call.1} parent=5 // pred_check
        %p177 = pneg %p176
      $region22: #{tpu_custom_call.1} parent=5 // pred_check_branch
        %179 = sbr.rel (%p177) target = $region24
      $region23: #{tpu_custom_call.1} parent=5 // pred_region
        // Predicated region
        $region25: #{tpu_custom_call.1} parent=23 // pred_check
          %p180 = pneg %p52
        $region26: #{tpu_custom_call.1} parent=23 // pred_check_branch
          %182 = sbr.rel (%p180) target = $region28
        $region27: #{tpu_custom_call.1} parent=23 // pred_region
          %p183 = scmp.lt.s32.totalorder %s20, 1
          %s184 = scalar_select %p183, %s20, 1
          %s185 = smul.addr %s184, 3
          %s186 = smul.addr %s185, 4
          %s187 = scalar_lea.vmem %s0, %s186
        $region28: #{tpu_custom_call.1} parent=23 // pred_fallthru
          _
      $region24: #{tpu_custom_call.1} parent=5 // pred_fallthru
        _
      %p188 = scmp.le.s32.totalorder 1, %s13
      %p189 = scmp.lt.s32.totalorder %s13, 3
      %p190 = pnand %p188, %p189
      %p191 = pneg %p190
      // Predicated region
      $region29: #{tpu_custom_call.1} parent=5 // pred_check
        _
      $region30: #{tpu_custom_call.1} parent=5 // pred_check_branch
        %193 = sbr.rel (%p190) target = $region32
      $region31: #{tpu_custom_call.1} parent=5 // pred_region
        %s194 = ssub.s32 %s13, 1
        // Predicated region
        $region33: #{tpu_custom_call.1} parent=31 // pred_check
          %p195 = pneg %p84
        $region34: #{tpu_custom_call.1} parent=31 // pred_check_branch
          %197 = sbr.rel (%p195) target = $region36
        $region35: #{tpu_custom_call.1} parent=31 // pred_region
          %198 = dma.done [#allocation3], 7168
        $region36: #{tpu_custom_call.1} parent=31 // pred_fallthru
          _
        %p199 = scmp.lt.s32.totalorder %s23, 1
        %s200 = scalar_select %p199, %s23, 1
        %s201 = smul.addr %s200, 3
        %s202 = smul.addr %s201, 4
        %s203 = scalar_lea.vmem %s0, %s202
        %p204 = pneg %p58
        %p205 = pneg %p55
        %p206 = pneg %p84
        %p207 = pneg %p81
        %p208 = scmp.lt.s32.totalorder %s25, 0
        %s209 = scalar_select %p208, %s25, 0
        %s210 = scalar_lea.vmem %s2, %s209
        %p211 = pneg %p110
        %p212 = pneg %p107
        %p213 = pneg %p140
        %p214 = pneg %p137
        %s215 = sand.u32 %s127, 1
        %s216 = scalar_lea.sflag [#allocation4], %s215
        %s217 = sand.u32 %s127, 1
        %s218 = smul.addr %s217, 16
        %s219 = scalar_lea.vmem [#allocation5], %s218
        %p220 = scmp.lt.s32.totalorder %s23, 1
        %s221 = scalar_select %p220, %s23, 1
        %s222 = smul.addr %s221, 3
        %s223 = smul.addr %s222, 4
        %s224 = scalar_lea.vmem %s0, %s223
        %p225 = scmp.lt.s32.totalorder %s25, 0
        %s226 = scalar_select %p225, %s25, 0
        %s227 = scalar_lea.vmem %s2, %s226
        %s228 = smul.u32 2, %s24
        %v230 = vld [vmem:[%s224] sm:$0xf]
        %v231 = vld [vmem:[%s224 + $0x4] sm:$0xf]
        %v232 = vld [vmem:[%s224 + $0x8] sm:$0x7]
        %v235 = vunpack.c.l.b16 %v230
        %v236 = vunpack.c.l.b16 %v231
        %v237 = vpack.c.b16 %v236, %v235
        %v240 = vunpack.c.l.b16 %v232
        %v241 = vpack.c.b16 %v240, %v240
        %vm242 = vsmask.f32 7424
        %v244 = vshrl.u32 %v237, 16
        %v246 = vshll.u32 %v237, 16
        %v248 = vrot.slane %v246, 1
        %v249 = vor.u32 %v244, %v248
        %v251 = vshll.u32 %v241, 16
        %v253 = vrot.slane %v251, 1
        %v254 = vsel %vm242, %v249, %v253
        %vm256 = vcmask 1046528
        %v257 = vrot.slane %v237, 1
        %v258 = vrot.slane %v241, 1
        %v259 = vsel %vm256, %v257, %v258
        %vm261 = vsmask.f32 6400
        %v262 = vrot.slane %v244, 1
        %v263 = vrot.slane %v246, 2
        %v264 = vor.u32 %v262, %v263
        %v265 = vshrl.u32 %v241, 16
        %v267 = vrot.slane %v265, 1
        %v268 = vrot.slane %v251, 2
        %v269 = vor.u32 %v267, %v268
        %v270 = vsel %vm261, %v264, %v269
        %vm272 = vcmask 1045504
        %v273 = vrot.slane %v237, 2
        %v274 = vrot.slane %v241, 2
        %v275 = vsel %vm272, %v273, %v274
        %vm277 = vsmask.f32 5376
        %v278 = vrot.slane %v244, 2
        %v279 = vrot.slane %v246, 3
        %v280 = vor.u32 %v278, %v279
        %v281 = vrot.slane %v265, 2
        %v282 = vrot.slane %v251, 3
        %v283 = vor.u32 %v281, %v282
        %v284 = vsel %vm277, %v280, %v283
        %vm286 = vcmask 1044480
        %v287 = vrot.slane %v237, 3
        %v288 = vrot.slane %v241, 3
        %v289 = vsel %vm286, %v287, %v288
        %v291 = vld [vmem:[#allocation2] sm:$0xf]
        %v292 = vld [vmem:[#allocation2 + $0x4] sm:$0xf]
        %v293 = vld [vmem:[#allocation2 + $0x8] sm:$0xf]
        %v294 = vld [vmem:[#allocation2 + $0xc] sm:$0xf]
        %v295 = vld [vmem:[#allocation2 + $0x10] sm:$0xf]
        %v296 = vld [vmem:[#allocation2 + $0x14] sm:$0xf]
        %v297 = vld [vmem:[#allocation2 + $0x18] sm:$0xf]
        %v298 = vld [vmem:[#allocation2 + $0x1c] sm:$0xf]
        %v299 = vld [vmem:[#allocation2 + $0x20] sm:$0xf]
        %v300 = vld [vmem:[#allocation2 + $0x24] sm:$0xf]
        %v301 = vld [vmem:[#allocation2 + $0x28] sm:$0xf]
        %v302 = vld [vmem:[#allocation2 + $0x2c] sm:$0xf]
        %v303 = vld [vmem:[#allocation2 + $0x30] sm:$0xf]
        %v304 = vld [vmem:[#allocation2 + $0x34] sm:$0xf]
        %v305 = vld [vmem:[#allocation2 + $0x38] sm:$0xf]
        %v306 = vld [vmem:[#allocation2 + $0x3c] sm:$0xf]
        %v307 = vld [vmem:[#allocation2 + $0x40] sm:$0xf]
        %v308 = vld [vmem:[#allocation2 + $0x44] sm:$0xf]
        %v309 = vld [vmem:[#allocation2 + $0x48] sm:$0xf]
        %v310 = vld [vmem:[#allocation2 + $0x4c] sm:$0xf]
        %v311 = vld [vmem:[#allocation2 + $0x50] sm:$0xf]
        %v312 = vld [vmem:[#allocation2 + $0x54] sm:$0xf]
        %v313 = vld [vmem:[#allocation2 + $0x58] sm:$0xf]
        %v314 = vld [vmem:[#allocation2 + $0x5c] sm:$0xf]
        %v315 = vld [vmem:[#allocation2 + $0x60] sm:$0xf]
        %v316 = vld [vmem:[#allocation2 + $0x64] sm:$0xf]
        %v317 = vld [vmem:[#allocation2 + $0x68] sm:$0xf]
        %v318 = vld [vmem:[#allocation2 + $0x6c] sm:$0xf]
        %v319 = vld [vmem:[#allocation2 + $0x70] sm:$0xf]
        %v320 = vld [vmem:[#allocation2 + $0x74] sm:$0xf]
        %v321 = vld [vmem:[#allocation2 + $0x78] sm:$0xf]
        %v322 = vld [vmem:[#allocation2 + $0x7c] sm:$0xf]
        %v323 = vld [vmem:[#allocation2 + $0x80] sm:$0xf]
        %v324 = vld [vmem:[#allocation2 + $0x84] sm:$0xf]
        %v325 = vld [vmem:[#allocation2 + $0x88] sm:$0xf]
        %v326 = vld [vmem:[#allocation2 + $0x8c] sm:$0xf]
        %v327 = vld [vmem:[#allocation2 + $0x90] sm:$0xf]
        %v328 = vld [vmem:[#allocation2 + $0x94] sm:$0xf]
        %v329 = vld [vmem:[#allocation2 + $0x98] sm:$0xf]
        %v330 = vld [vmem:[#allocation2 + $0x9c] sm:$0xf]
        %v331 = vld [vmem:[#allocation2 + $0xa0] sm:$0xf]
        %v332 = vld [vmem:[#allocation2 + $0xa4] sm:$0xf]
        %v333 = vld [vmem:[#allocation2 + $0xa8] sm:$0xf]
        %v334 = vld [vmem:[#allocation2 + $0xac] sm:$0xf]
        %v335 = vld [vmem:[#allocation2 + $0xb0] sm:$0xf]
        %v336 = vld [vmem:[#allocation2 + $0xb4] sm:$0xf]
        %v337 = vld [vmem:[#allocation2 + $0xb8] sm:$0xf]
        %v338 = vld [vmem:[#allocation2 + $0xbc] sm:$0xf]
        %v339 = vld [vmem:[#allocation2 + $0xc0] sm:$0xf]
        %v340 = vld [vmem:[#allocation2 + $0xc4] sm:$0xf]
        %v341 = vld [vmem:[#allocation2 + $0xc8] sm:$0xf]
        %v342 = vld [vmem:[#allocation2 + $0xcc] sm:$0xf]
        %v343 = vld [vmem:[#allocation2 + $0xd0] sm:$0xf]
        %v344 = vld [vmem:[#allocation2 + $0xd4] sm:$0xf]
        %v345 = vld [vmem:[#allocation2 + $0xd8] sm:$0xf]
        %v346 = vld [vmem:[#allocation2 + $0xdc] sm:$0xf]
        %v347 = vld [vmem:[#allocation2 + $0xe0] sm:$0xf]
        %v348 = vld [vmem:[#allocation2 + $0xe4] sm:$0xf]
        %v349 = vld [vmem:[#allocation2 + $0xe8] sm:$0xf]
        %v350 = vld [vmem:[#allocation2 + $0xec] sm:$0xf]
        %v351 = vld [vmem:[#allocation2 + $0xf0] sm:$0xf]
        %v352 = vld [vmem:[#allocation2 + $0xf4] sm:$0xf]
        %v353 = vld [vmem:[#allocation2 + $0xf8] sm:$0xf]
        %v354 = vld [vmem:[#allocation2 + $0xfc] sm:$0xf]
        %v355 = vld [vmem:[#allocation2 + $0x100] sm:$0xf]
        %v356 = vld [vmem:[#allocation2 + $0x104] sm:$0xf]
        %v357 = vld [vmem:[#allocation2 + $0x108] sm:$0xf]
        %v358 = vld [vmem:[#allocation2 + $0x10c] sm:$0xf]
        %v359 = vld [vmem:[#allocation2 + $0x110] sm:$0xf]
        %v360 = vld [vmem:[#allocation2 + $0x114] sm:$0xf]
        %v361 = vld [vmem:[#allocation2 + $0x118] sm:$0xf]
        %v362 = vld [vmem:[#allocation2 + $0x11c] sm:$0xf]
        %v363 = vld [vmem:[#allocation2 + $0x120] sm:$0xf]
        %v364 = vld [vmem:[#allocation2 + $0x124] sm:$0xf]
        %v365 = vld [vmem:[#allocation2 + $0x128] sm:$0xf]
        %v366 = vld [vmem:[#allocation2 + $0x12c] sm:$0xf]
        %v367 = vld [vmem:[#allocation2 + $0x130] sm:$0xf]
        %v368 = vld [vmem:[#allocation2 + $0x134] sm:$0xf]
        %v369 = vld [vmem:[#allocation2 + $0x138] sm:$0xf]
        %v370 = vld [vmem:[#allocation2 + $0x13c] sm:$0xf]
        %v371 = vld [vmem:[#allocation2 + $0x140] sm:$0xf]
        %v372 = vld [vmem:[#allocation2 + $0x144] sm:$0xf]
        %v373 = vld [vmem:[#allocation2 + $0x148] sm:$0xf]
        %v374 = vld [vmem:[#allocation2 + $0x14c] sm:$0xf]
        %v375 = vld [vmem:[#allocation2 + $0x150] sm:$0xf]
        %v376 = vld [vmem:[#allocation2 + $0x154] sm:$0xf]
        %v377 = vld [vmem:[#allocation2 + $0x158] sm:$0xf]
        %v378 = vld [vmem:[#allocation2 + $0x15c] sm:$0xf]
        %v379 = vld [vmem:[#allocation2 + $0x160] sm:$0xf]
        %v380 = vld [vmem:[#allocation2 + $0x164] sm:$0xf]
        %v381 = vld [vmem:[#allocation2 + $0x168] sm:$0xf]
        %v382 = vld [vmem:[#allocation2 + $0x16c] sm:$0xf]
        %v383 = vld [vmem:[#allocation2 + $0x170] sm:$0xf]
        %v384 = vld [vmem:[#allocation2 + $0x174] sm:$0xf]
        %v385 = vld [vmem:[#allocation2 + $0x178] sm:$0xf]
        %v386 = vld [vmem:[#allocation2 + $0x17c] sm:$0xf]
        %v387 = vld [vmem:[#allocation2 + $0x180] sm:$0xf]
        %v388 = vld [vmem:[#allocation2 + $0x184] sm:$0xf]
        %v389 = vld [vmem:[#allocation2 + $0x188] sm:$0xf]
        %v390 = vld [vmem:[#allocation2 + $0x18c] sm:$0xf]
        %v391 = vld [vmem:[#allocation2 + $0x190] sm:$0xf]
        %v392 = vld [vmem:[#allocation2 + $0x194] sm:$0xf]
        %v393 = vld [vmem:[#allocation2 + $0x198] sm:$0xf]
        %v394 = vld [vmem:[#allocation2 + $0x19c] sm:$0xf]
        %v395 = vld [vmem:[#allocation2 + $0x1a0] sm:$0xf]
        %v396 = vld [vmem:[#allocation2 + $0x1a4] sm:$0xf]
        %v397 = vld [vmem:[#allocation2 + $0x1a8] sm:$0xf]
        %v398 = vld [vmem:[#allocation2 + $0x1ac] sm:$0xf]
        %v399 = vld [vmem:[#allocation2 + $0x1b0] sm:$0xf]
        %v400 = vld [vmem:[#allocation2 + $0x1b4] sm:$0xf]
        %v401 = vld [vmem:[#allocation2 + $0x1b8] sm:$0xf]
        %v402 = vld [vmem:[#allocation2 + $0x1bc] sm:$0xf]
        %v403 = vld [vmem:[%s227] sm:$0x1]
        %v405 = vlaneseq
        %v406 = vshrl.u32 %v405, 7
        %v407 = vsub.s32 0, %v406
        %v408 = vrot.slane %v403, %v407
        %v522 = vunpack.c.l.b16 %v291
        %v523 = vunpack.c.l.b16 %v292
        %v524 = vunpack.c.l.b16 %v293
        %v525 = vunpack.c.l.b16 %v294
        %v526 = vunpack.c.l.b16 %v295
        %v527 = vunpack.c.l.b16 %v296
        %v528 = vunpack.c.l.b16 %v297
        %v529 = vunpack.c.l.b16 %v298
        %v530 = vunpack.c.l.b16 %v299
        %v531 = vunpack.c.l.b16 %v300
        %v532 = vunpack.c.l.b16 %v301
        %v533 = vunpack.c.l.b16 %v302
        %v534 = vunpack.c.l.b16 %v303
        %v535 = vunpack.c.l.b16 %v304
        %v536 = vunpack.c.l.b16 %v305
        %v537 = vunpack.c.l.b16 %v306
        %v538 = vunpack.c.l.b16 %v307
        %v539 = vunpack.c.l.b16 %v308
        %v540 = vunpack.c.l.b16 %v309
        %v541 = vunpack.c.l.b16 %v310
        %v542 = vunpack.c.l.b16 %v311
        %v543 = vunpack.c.l.b16 %v312
        %v544 = vunpack.c.l.b16 %v313
        %v545 = vunpack.c.l.b16 %v314
        %v546 = vunpack.c.l.b16 %v315
        %v547 = vunpack.c.l.b16 %v316
        %v548 = vunpack.c.l.b16 %v317
        %v549 = vunpack.c.l.b16 %v318
        %v550 = vunpack.c.l.b16 %v319
        %v551 = vunpack.c.l.b16 %v320
        %v552 = vunpack.c.l.b16 %v321
        %v553 = vunpack.c.l.b16 %v322
        %v554 = vunpack.c.l.b16 %v323
        %v555 = vunpack.c.l.b16 %v324
        %v556 = vunpack.c.l.b16 %v325
        %v557 = vunpack.c.l.b16 %v326
        %v558 = vunpack.c.l.b16 %v327
        %v559 = vunpack.c.l.b16 %v328
        %v560 = vunpack.c.l.b16 %v329
        %v561 = vunpack.c.l.b16 %v330
        %v562 = vunpack.c.l.b16 %v331
        %v563 = vunpack.c.l.b16 %v332
        %v564 = vunpack.c.l.b16 %v333
        %v565 = vunpack.c.l.b16 %v334
        %v566 = vunpack.c.l.b16 %v335
        %v567 = vunpack.c.l.b16 %v336
        %v568 = vunpack.c.l.b16 %v337
        %v569 = vunpack.c.l.b16 %v338
        %v570 = vunpack.c.l.b16 %v339
        %v571 = vunpack.c.l.b16 %v340
        %v572 = vunpack.c.l.b16 %v341
        %v573 = vunpack.c.l.b16 %v342
        %v574 = vunpack.c.l.b16 %v343
        %v575 = vunpack.c.l.b16 %v344
        %v576 = vunpack.c.l.b16 %v345
        %v577 = vunpack.c.l.b16 %v346
        %v578 = vunpack.c.l.b16 %v347
        %v579 = vunpack.c.l.b16 %v348
        %v580 = vunpack.c.l.b16 %v349
        %v581 = vunpack.c.l.b16 %v350
        %v582 = vunpack.c.l.b16 %v351
        %v583 = vunpack.c.l.b16 %v352
        %v584 = vunpack.c.l.b16 %v353
        %v585 = vunpack.c.l.b16 %v354
        %v586 = vunpack.c.l.b16 %v355
        %v587 = vunpack.c.l.b16 %v356
        %v588 = vunpack.c.l.b16 %v357
        %v589 = vunpack.c.l.b16 %v358
        %v590 = vunpack.c.l.b16 %v359
        %v591 = vunpack.c.l.b16 %v360
        %v592 = vunpack.c.l.b16 %v361
        %v593 = vunpack.c.l.b16 %v362
        %v594 = vunpack.c.l.b16 %v363
        %v595 = vunpack.c.l.b16 %v364
        %v596 = vunpack.c.l.b16 %v365
        %v597 = vunpack.c.l.b16 %v366
        %v598 = vunpack.c.l.b16 %v367
        %v599 = vunpack.c.l.b16 %v368
        %v600 = vunpack.c.l.b16 %v369
        %v601 = vunpack.c.l.b16 %v370
        %v602 = vunpack.c.l.b16 %v371
        %v603 = vunpack.c.l.b16 %v372
        %v604 = vunpack.c.l.b16 %v373
        %v605 = vunpack.c.l.b16 %v374
        %v606 = vunpack.c.l.b16 %v375
        %v607 = vunpack.c.l.b16 %v376
        %v608 = vunpack.c.l.b16 %v377
        %v609 = vunpack.c.l.b16 %v378
        %v610 = vunpack.c.l.b16 %v379
        %v611 = vunpack.c.l.b16 %v380
        %v612 = vunpack.c.l.b16 %v381
        %v613 = vunpack.c.l.b16 %v382
        %v614 = vunpack.c.l.b16 %v383
        %v615 = vunpack.c.l.b16 %v384
        %v616 = vunpack.c.l.b16 %v385
        %v617 = vunpack.c.l.b16 %v386
        %v618 = vunpack.c.l.b16 %v387
        %v619 = vunpack.c.l.b16 %v388
        %v620 = vunpack.c.l.b16 %v389
        %v621 = vunpack.c.l.b16 %v390
        %v622 = vunpack.c.l.b16 %v391
        %v623 = vunpack.c.l.b16 %v392
        %v624 = vunpack.c.l.b16 %v393
        %v625 = vunpack.c.l.b16 %v394
        %v626 = vunpack.c.l.b16 %v395
        %v627 = vunpack.c.l.b16 %v396
        %v628 = vunpack.c.l.b16 %v397
        %v629 = vunpack.c.l.b16 %v398
        %v630 = vunpack.c.l.b16 %v399
        %v631 = vunpack.c.l.b16 %v400
        %v632 = vunpack.c.l.b16 %v401
        %v633 = vunpack.c.l.b16 %v402
        %v634 = vpack.c.b16 %v523, %v522
        %v635 = vpack.c.b16 %v525, %v524
        %v636 = vpack.c.b16 %v527, %v526
        %v637 = vpack.c.b16 %v529, %v528
        %v638 = vpack.c.b16 %v531, %v530
        %v639 = vpack.c.b16 %v533, %v532
        %v640 = vpack.c.b16 %v535, %v534
        %v641 = vpack.c.b16 %v537, %v536
        %v642 = vpack.c.b16 %v539, %v538
        %v643 = vpack.c.b16 %v541, %v540
        %v644 = vpack.c.b16 %v543, %v542
        %v645 = vpack.c.b16 %v545, %v544
        %v646 = vpack.c.b16 %v547, %v546
        %v647 = vpack.c.b16 %v549, %v548
        %v648 = vpack.c.b16 %v551, %v550
        %v649 = vpack.c.b16 %v553, %v552
        %v650 = vpack.c.b16 %v555, %v554
        %v651 = vpack.c.b16 %v557, %v556
        %v652 = vpack.c.b16 %v559, %v558
        %v653 = vpack.c.b16 %v561, %v560
        %v654 = vpack.c.b16 %v563, %v562
        %v655 = vpack.c.b16 %v565, %v564
        %v656 = vpack.c.b16 %v567, %v566
        %v657 = vpack.c.b16 %v569, %v568
        %v658 = vpack.c.b16 %v571, %v570
        %v659 = vpack.c.b16 %v573, %v572
        %v660 = vpack.c.b16 %v575, %v574
        %v661 = vpack.c.b16 %v577, %v576
        %v662 = vpack.c.b16 %v579, %v578
        %v663 = vpack.c.b16 %v581, %v580
        %v664 = vpack.c.b16 %v583, %v582
        %v665 = vpack.c.b16 %v585, %v584
        %v666 = vpack.c.b16 %v587, %v586
        %v667 = vpack.c.b16 %v589, %v588
        %v668 = vpack.c.b16 %v591, %v590
        %v669 = vpack.c.b16 %v593, %v592
        %v670 = vpack.c.b16 %v595, %v594
        %v671 = vpack.c.b16 %v597, %v596
        %v672 = vpack.c.b16 %v599, %v598
        %v673 = vpack.c.b16 %v601, %v600
        %v674 = vpack.c.b16 %v603, %v602
        %v675 = vpack.c.b16 %v605, %v604
        %v676 = vpack.c.b16 %v607, %v606
        %v677 = vpack.c.b16 %v609, %v608
        %v678 = vpack.c.b16 %v611, %v610
        %v679 = vpack.c.b16 %v613, %v612
        %v680 = vpack.c.b16 %v615, %v614
        %v681 = vpack.c.b16 %v617, %v616
        %v682 = vpack.c.b16 %v619, %v618
        %v683 = vpack.c.b16 %v621, %v620
        %v684 = vpack.c.b16 %v623, %v622
        %v685 = vpack.c.b16 %v625, %v624
        %v686 = vpack.c.b16 %v627, %v626
        %v687 = vpack.c.b16 %v629, %v628
        %v688 = vpack.c.b16 %v631, %v630
        %v689 = vpack.c.b16 %v633, %v632
        %746 = vmatprep.subr.bf16.mxu0 0
        %747 = vmatpush1.bf16.msra.mxu0 %v634
        %748 = vmatprep.subr.bf16.mxu0 0
        %749 = vmatpush1.bf16.msra.mxu0 %v635
        %750 = vmatprep.subr.bf16.mxu0 0
        %751 = vmatpush1.bf16.msra.mxu0 %v636
        %752 = vmatprep.subr.bf16.mxu0 0
        %753 = vmatpush1.bf16.msra.mxu0 %v637
        %754 = vmatprep.subr.bf16.mxu0 0
        %755 = vmatpush1.bf16.msra.mxu0 %v638
        %756 = vmatprep.subr.bf16.mxu0 0
        %757 = vmatpush1.bf16.msra.mxu0 %v639
        %758 = vmatprep.subr.bf16.mxu0 0
        %759 = vmatpush1.bf16.msra.mxu0 %v640
        %760 = vmatprep.subr.bf16.mxu0 0
        %761 = vmatpush1.bf16.msra.mxu0 %v641
        %762 = vmatprep.subr.bf16.mxu0 0
        %763 = vmatpush1.bf16.msra.mxu0 %v642
        %764 = vmatprep.subr.bf16.mxu0 0
        %765 = vmatpush1.bf16.msra.mxu0 %v643
        %766 = vmatprep.subr.bf16.mxu0 0
        %767 = vmatpush1.bf16.msra.mxu0 %v644
        %768 = vmatprep.subr.bf16.mxu0 0
        %769 = vmatpush1.bf16.msra.mxu0 %v645
        %770 = vmatprep.subr.bf16.mxu0 0
        %771 = vmatpush1.bf16.msra.mxu0 %v646
        %772 = vmatprep.subr.bf16.mxu0 0
        %773 = vmatpush1.bf16.msra.mxu0 %v647
        %774 = vmatprep.subr.bf16.mxu0 0
        %775 = vmatpush1.bf16.msra.mxu0 %v648
        %776 = vmatprep.subr.bf16.mxu0 0
        %777 = vmatpush1.bf16.msra.mxu0 %v649
        %778 = vmatprep.mubr.bf16.mxu0 %v254
        %779 = vmatmul.mubr.bf16.gmra.mrb[0].mxu0 %v237
        %v780 = vpop.f32.mrb[0].mxu0
        %v781 = vadd.f32 %v408, %v780
        %v782 = vpop.f32.mrb[0].mxu0
        %v783 = vpop.f32.mrb[0].mxu0
        %v784 = vadd.f32 %v408, %v783
        %v785 = vpop.f32.mrb[0].mxu0
        %786 = vdwg.mxu0
        %787 = vmatprep.subr.bf16.mxu0 0
        %788 = vmatpush1.bf16.msra.mxu0 %v650
        %789 = vmatprep.subr.bf16.mxu0 0
        %790 = vmatpush1.bf16.msra.mxu0 %v651
        %791 = vmatprep.subr.bf16.mxu0 0
        %792 = vmatpush1.bf16.msra.mxu0 %v652
        %793 = vmatprep.subr.bf16.mxu0 0
        %794 = vmatpush1.bf16.msra.mxu0 %v653
        %795 = vmatprep.subr.bf16.mxu0 0
        %796 = vmatpush1.bf16.msra.mxu0 %v654
        %797 = vmatprep.subr.bf16.mxu0 0
        %798 = vmatpush1.bf16.msra.mxu0 %v655
        %799 = vmatprep.subr.bf16.mxu0 0
        %800 = vmatpush1.bf16.msra.mxu0 %v656
        %801 = vmatprep.subr.bf16.mxu0 0
        %802 = vmatpush1.bf16.msra.mxu0 %v657
        %803 = vmatprep.subr.bf16.mxu0 0
        %804 = vmatpush1.bf16.msra.mxu0 %v658
        %805 = vmatprep.subr.bf16.mxu0 0
        %806 = vmatpush1.bf16.msra.mxu0 %v659
        %807 = vmatprep.subr.bf16.mxu0 0
        %808 = vmatpush1.bf16.msra.mxu0 %v660
        %809 = vmatprep.subr.bf16.mxu0 0
        %810 = vmatpush1.bf16.msra.mxu0 %v661
        %811 = vmatprep.subr.bf16.mxu0 0
        %812 = vmatpush1.bf16.msra.mxu0 %v662
        %813 = vmatprep.subr.bf16.mxu0 0
        %814 = vmatpush1.bf16.msra.mxu0 %v663
        %815 = vmatprep.subr.bf16.mxu0 0
        %816 = vmatpush1.bf16.msra.mxu0 %v664
        %817 = vmatprep.subr.bf16.mxu0 0
        %818 = vmatpush1.bf16.msra.mxu0 %v665
        %819 = vmatprep.mubr.bf16.mxu0 %v270
        %820 = vmatmul.mubr.bf16.gmra.mrb[0].mxu0 %v259
        %v821 = vpop.f32.mrb[0].mxu0
        %v822 = vadd.f32 %v781, %v821
        %v823 = vpop.f32.mrb[0].mxu0
        %v824 = vpop.f32.mrb[0].mxu0
        %v825 = vadd.f32 %v784, %v824
        %v826 = vpop.f32.mrb[0].mxu0
        %827 = vdwg.mxu0
        %828 = vmatprep.subr.bf16.mxu0 0
        %829 = vmatpush1.bf16.msra.mxu0 %v666
        %830 = vmatprep.subr.bf16.mxu0 0
        %831 = vmatpush1.bf16.msra.mxu0 %v667
        %832 = vmatprep.subr.bf16.mxu0 0
        %833 = vmatpush1.bf16.msra.mxu0 %v668
        %834 = vmatprep.subr.bf16.mxu0 0
        %835 = vmatpush1.bf16.msra.mxu0 %v669
        %836 = vmatprep.subr.bf16.mxu0 0
        %837 = vmatpush1.bf16.msra.mxu0 %v670
        %838 = vmatprep.subr.bf16.mxu0 0
        %839 = vmatpush1.bf16.msra.mxu0 %v671
        %840 = vmatprep.subr.bf16.mxu0 0
        %841 = vmatpush1.bf16.msra.mxu0 %v672
        %842 = vmatprep.subr.bf16.mxu0 0
        %843 = vmatpush1.bf16.msra.mxu0 %v673
        %844 = vmatprep.subr.bf16.mxu0 0
        %845 = vmatpush1.bf16.msra.mxu0 %v674
        %846 = vmatprep.subr.bf16.mxu0 0
        %847 = vmatpush1.bf16.msra.mxu0 %v675
        %848 = vmatprep.subr.bf16.mxu0 0
        %849 = vmatpush1.bf16.msra.mxu0 %v676
        %850 = vmatprep.subr.bf16.mxu0 0
        %851 = vmatpush1.bf16.msra.mxu0 %v677
        %852 = vmatprep.subr.bf16.mxu0 0
        %853 = vmatpush1.bf16.msra.mxu0 %v678
        %854 = vmatprep.subr.bf16.mxu0 0
        %855 = vmatpush1.bf16.msra.mxu0 %v679
        %856 = vmatprep.subr.bf16.mxu0 0
        %857 = vmatpush1.bf16.msra.mxu0 %v680
        %858 = vmatprep.subr.bf16.mxu0 0
        %859 = vmatpush1.bf16.msra.mxu0 %v681
        %860 = vmatprep.mubr.bf16.mxu0 %v284
        %861 = vmatmul.mubr.bf16.gmra.mrb[0].mxu0 %v275
        %v862 = vpop.f32.mrb[0].mxu0
        %v863 = vadd.f32 %v822, %v862
        %v864 = vpop.f32.mrb[0].mxu0
        %v865 = vpop.f32.mrb[0].mxu0
        %v866 = vadd.f32 %v825, %v865
        %v867 = vpop.f32.mrb[0].mxu0
        %868 = vdwg.mxu0
        %869 = vmatprep.subr.bf16.mxu0 0
        %870 = vmatpush1.bf16.msra.mxu0 %v682
        %871 = vmatprep.subr.bf16.mxu0 0
        %872 = vmatpush1.bf16.msra.mxu0 %v683
        %873 = vmatprep.subr.bf16.mxu0 0
        %874 = vmatpush1.bf16.msra.mxu0 %v684
        %875 = vmatprep.subr.bf16.mxu0 0
        %876 = vmatpush1.bf16.msra.mxu0 %v685
        %877 = vmatprep.subr.bf16.mxu0 0
        %878 = vmatpush1.bf16.msra.mxu0 %v686
        %879 = vmatprep.subr.bf16.mxu0 0
        %880 = vmatpush1.bf16.msra.mxu0 %v687
        %881 = vmatprep.subr.bf16.mxu0 0
        %882 = vmatpush1.bf16.msra.mxu0 %v688
        %883 = vmatprep.subr.bf16.mxu0 0
        %884 = vmatpush1.bf16.msra.mxu0 %v689
        %885 = vmatprep.subr.bf16.mxu0 0
        %886 = vmatpush1.bf16.msra.mxu0 0
        %887 = vmatprep.subr.bf16.mxu0 0
        %888 = vmatpush1.bf16.msra.mxu0 0
        %889 = vmatprep.subr.bf16.mxu0 0
        %890 = vmatpush1.bf16.msra.mxu0 0
        %891 = vmatprep.subr.bf16.mxu0 0
        %892 = vmatpush1.bf16.msra.mxu0 0
        %893 = vmatprep.subr.bf16.mxu0 0
        %894 = vmatpush1.bf16.msra.mxu0 0
        %895 = vmatprep.subr.bf16.mxu0 0
        %896 = vmatpush1.bf16.msra.mxu0 0
        %897 = vmatprep.subr.bf16.mxu0 0
        %898 = vmatpush1.bf16.msra.mxu0 0
        %899 = vmatprep.subr.bf16.mxu0 0
        %900 = vmatpush1.bf16.msra.mxu0 0
        %901 = vmatprep.mubr.bf16.mxu0 0
        %902 = vmatmul.mubr.bf16.gmra.mrb[0].mxu0 %v289
        %v903 = vpop.f32.mrb[0].mxu0
        %v904 = vadd.f32 %v863, %v903
        %v905 = vpop.f32.mrb[0].mxu0
        %v906 = vpop.f32.mrb[0].mxu0
        %v907 = vadd.f32 %v866, %v906
        %v908 = vpop.f32.mrb[0].mxu0
        %909 = vdwg.mxu0
        %910 = vst [vmem:[%s219] sm:$0xff] %v904
        %911 = vst [vmem:[%s219 + $0x8] sm:$0xff] %v907
        %s912 = sand.u32 %s127, 1
        %s913 = scalar_lea.sflag [#allocation4], %s912
        %s914 = sand.u32 %s127, 1
        %s915 = smul.addr %s914, 16
        %s916 = scalar_lea.vmem [#allocation5], %s915
        // Predicated region
        $region37: #{tpu_custom_call.1} parent=31 // pred_check
          %p917 = pneg %p137
        $region38: #{tpu_custom_call.1} parent=31 // pred_check_branch
          %919 = sbr.rel (%p917) target = $region40
        $region39: #{tpu_custom_call.1} parent=31 // pred_region
          %s920 = smul.u32 2, %s24
          %s922 = ssub.s32 256, 256
          %923 = vsyncadd %s913, %s922
          %s924 = sadd.s32 %s25, %s920
          %s925 = smul.addr %s23, 2
          %s926 = sadd.s32 %s924, %s925
          %s927 = smul.addr %s926, 128
          %s928 = scalar_lea.hbm %s3, %s927
          %s929 = sshll.u32 %s916, 4
          %s930 = int_to_ptr.vmem [resolvable:$true] %s929
          %935 = dma.vmem_to_hbm [thread:$0]  %s930, 256, %s928, %s913, 128, 128, 8
        $region40: #{tpu_custom_call.1} parent=31 // pred_fallthru
          _
      $region32: #{tpu_custom_call.1} parent=5 // pred_fallthru
        _
      %p936 = scmp.le.s32.totalorder 2, %s13
      // Predicated region
      $region41: #{tpu_custom_call.1} parent=5 // pred_check
        %p937 = pneg %p936
      $region42: #{tpu_custom_call.1} parent=5 // pred_check_branch
        %939 = sbr.rel (%p937) target = $region44
      $region43: #{tpu_custom_call.1} parent=5 // pred_region
        %s940 = ssub.s32 %s13, 2
        // Predicated region
        $region45: #{tpu_custom_call.1} parent=43 // pred_check
          %p941 = pneg %p143
        $region46: #{tpu_custom_call.1} parent=43 // pred_check_branch
          %943 = sbr.rel (%p941) target = $region48
        $region47: #{tpu_custom_call.1} parent=43 // pred_region
          %s944 = sand.u32 %s128, 1
          %s945 = scalar_lea.sflag [#allocation4], %s944
          %s946 = sand.u32 %s128, 1
          %s947 = smul.addr %s946, 16
          %s948 = scalar_lea.vmem [#allocation5], %s947
          %949 = dma.done %s945, 256
        $region48: #{tpu_custom_call.1} parent=43 // pred_fallthru
          _
      $region44: #{tpu_custom_call.1} parent=5 // pred_fallthru
        _
    $region6: #{tpu_custom_call.1} parent=1 // loop_footer
      %s17 = sadd.s32 1, %s13
    $region7: #{tpu_custom_call.1} parent=1 // loop_footer_branch
      %12 = sbr.rel target = $region3
    $region8: #{tpu_custom_call.1} parent=1 // loop_exit
      _
    %950 = vsyncpa [#allocation3], 1
    %s951 = scalar_lea.sflag [#allocation3], 1
    %952 = vsyncpa %s951, 1
    %953 = vsyncpa [#allocation4], 1
    %s954 = scalar_lea.sflag [#allocation4], 1
    %955 = vsyncpa %s954, 1

</llo_original>
